<compile_context>
chip_gen: v6e
topology: v6e:2x2x1
jax: 0.10.0
libtpu: 0.0.40
codegen_flags: <defaults>
</compile_context>

<pallas_src>
import math
import functools

import jax
import jax.numpy as jnp
from jax.experimental import pallas as pl
from jax.experimental.pallas import tpu as pltpu


def _default_vmem_limit():
    # ~3/4 of per-TensorCore VMEM: 96 MiB on v5e/v6e (128 MiB physical),
    # 48 MiB on v7x (64 MiB physical). Conservative 32 MiB fallback.
    try:
        cap = getattr(pltpu.get_tpu_info(), "vmem_capacity_bytes", None)
        if cap:
            return min((int(cap) * 3) // 4, 96 * 1024 * 1024)
    except Exception:
        pass
    return 32 * 1024 * 1024


_VMEM_LIMIT = _default_vmem_limit()


# ---------------------------------------------------------------------------
# Kernel 1: row-tiled dense linear  y = x @ W_t + b   (W_t is K-major, bf16)
# ---------------------------------------------------------------------------
def _linear_kernel(x_ref, wt_ref, b_ref, o_ref):
    # x: (tm, E_in)  wt: (E_in, E_out) bf16  b: (1, E_out) f32  o: (tm, E_out) bf16
    acc = jnp.dot(x_ref[...].astype(jnp.bfloat16), wt_ref[...],
                  preferred_element_type=jnp.float32)
    o_ref[...] = (acc + b_ref[...]).astype(o_ref.dtype)


def linear(x, w_t, b, *, row_tile=1024, out_dtype=jnp.bfloat16):
    n, e_in = x.shape
    e_out = w_t.shape[1]
    tm = n if n <= row_tile else row_tile          # row-tiled, pipelined grid
    return pl.pallas_call(
        _linear_kernel,
        out_shape=jax.ShapeDtypeStruct((n, e_out), out_dtype),
        grid=(pl.cdiv(n, tm),),
        in_specs=[
            pl.BlockSpec((tm, e_in), lambda i: (i, 0)),      # streamed rows
            pl.BlockSpec((e_in, e_out), lambda i: (0, 0)),   # weight resident
            pl.BlockSpec((1, e_out), lambda i: (0, 0)),      # bias resident
        ],
        out_specs=pl.BlockSpec((tm, e_out), lambda i: (i, 0)),
        compiler_params=pltpu.CompilerParams(
            dimension_semantics=("parallel",),
            vmem_limit_bytes=_VMEM_LIMIT),
    )(x, w_t.astype(jnp.bfloat16), b.reshape(1, e_out).astype(jnp.float32))


# ---------------------------------------------------------------------------
# Kernel 2: multi-head attention for one (batch item, query tile).
#   All heads processed in-kernel; output projection fused into the epilogue;
#   head-averaged attention weights (optional) accumulated in VMEM.
# ---------------------------------------------------------------------------
def _mha_kernel(q_ref, k_ref, v_ref, wo_ref, bo_ref, out_ref, *maybe_attw,
                nhead, scale, need_weights):
    # q_ref  (1, tq, E) bf16       k_ref / v_ref (1, S, E) bf16
    # wo_ref (E, E) bf16 K-major   bo_ref (1, E) f32
    # out_ref (1, tq, E) f32       attw_ref (1, tq, S) f32 (optional)
    attw_ref = maybe_attw[0] if need_weights else None
    _, tq, e = out_ref.shape
    dh = e // nhead

    # Accumulators live in the VMEM-resident output blocks, not in vregs.
    out_ref[0] = jnp.zeros((tq, e), jnp.float32)
    if need_weights:
        attw_ref[0] = jnp.zeros((tq, attw_ref.shape[2]), jnp.float32)

    # Static head loop; only per-head temporaries (s, p, ctx) stay in vregs
    # because partial results are accumulated straight into the output refs.
    for h in range(nhead):
        lo = h * dh
        qh = q_ref[0, :, lo:lo + dh]          # (tq, Dh) bf16
        kh = k_ref[0, :, lo:lo + dh]          # (S,  Dh) bf16
        vh = v_ref[0, :, lo:lo + dh]          # (S,  Dh) bf16

        # scores: contract Dh(q) with Dh(k) -- no in-kernel transpose.
        s = jax.lax.dot_general(qh, kh, (((1,), (1,)), ((), ())),
                                preferred_element_type=jnp.float32) * scale
        m = jnp.max(s, axis=-1, keepdims=True)
        p = jnp.exp(s - m)
        denom = jnp.sum(p, axis=-1, keepdims=True)
        p = p * pl.reciprocal(denom)          # exact: rows sum to 1 (parity)

        ctx = jnp.dot(p.astype(jnp.bfloat16), vh,
                      preferred_element_type=jnp.float32)       # (tq, Dh)
        # Fused output projection: ctx_h @ Wo^T rows for this head, summed.
        out_ref[0] += jnp.dot(ctx.astype(jnp.bfloat16),
                              wo_ref[lo:lo + dh, :],
                              preferred_element_type=jnp.float32)
        if need_weights:
            attw_ref[0] += p

    out_ref[0] += bo_ref[...]                 # (1,E) broadcast over (tq,E)
    if need_weights:
        attw_ref[0] = attw_ref[0] * (1.0 / nhead)


def attention(q_src, k_src, v_src, wo_t, b_out, *, nhead,
              q_blk=0, k_blk=0, v_blk=0, need_weights=True, q_tile=256):
    # q_src (B, L, m*E) with the Q projection at column-block q_blk;
    # k_src/v_src (B, S, m*E) likewise. Column-blocked BlockSpecs DMA only
    # the E columns each operand needs (no wasted Q/K/V thirds, no concat).
    B, L, _ = q_src.shape
    S = k_src.shape[1]
    E = wo_t.shape[0]
    dh = E // nhead
    scale = 1.0 / math.sqrt(dh)

    tq = L if L <= q_tile else q_tile
    # v7x has 2 TensorCores/chip: keep >= 2 grid steps so ("parallel","parallel")
    # can shard across them even for B == 1.
    if B * ((L + tq - 1) // tq) < 2 and L >= 16:
        tq = (((L + 1) // 2) + 7) // 8 * 8

    kernel = functools.partial(_mha_kernel, nhead=nhead, scale=scale,
                               need_weights=need_weights)

    out_spec = pl.BlockSpec((1, tq, E), lambda b, l: (b, l, 0))
    if need_weights:
        out_shape = (jax.ShapeDtypeStruct((B, L, E), jnp.float32),
                     jax.ShapeDtypeStruct((B, L, S), jnp.float32))
        out_specs = (out_spec, pl.BlockSpec((1, tq, S), lambda b, l: (b, l, 0)))
    else:
        out_shape = jax.ShapeDtypeStruct((B, L, E), jnp.float32)
        out_specs = out_spec

    # TODO(synk): for very long S on v7x (64 MiB VMEM) add an "arbitrary"
    # KV-tile grid axis or pipeline_mode=pl.Buffered(1) on the K/V specs
    # (their block index is constant within a batch item).
    return pl.pallas_call(
        kernel,
        out_shape=out_shape,
        grid=(B, pl.cdiv(L, tq)),
        in_specs=[
            pl.BlockSpec((1, tq, E), lambda b, l: (b, l, q_blk)),   # Q columns
            pl.BlockSpec((1, S, E), lambda b, l: (b, 0, k_blk)),    # K resident/b
            pl.BlockSpec((1, S, E), lambda b, l: (b, 0, v_blk)),    # V resident/b
            pl.BlockSpec((E, E), lambda b, l: (0, 0)),              # Wo^T resident
            pl.BlockSpec((1, E), lambda b, l: (0, 0)),              # bo resident
        ],
        out_specs=out_specs,
        compiler_params=pltpu.CompilerParams(
            dimension_semantics=("parallel", "parallel"),
            vmem_limit_bytes=_VMEM_LIMIT),
    )(q_src.astype(jnp.bfloat16), k_src.astype(jnp.bfloat16),
      v_src.astype(jnp.bfloat16), wo_t.astype(jnp.bfloat16),
      b_out.reshape(1, E).astype(jnp.float32))


# ---------------------------------------------------------------------------
# Full forward (only free metadata reshapes in XLA; weights transposed once)
# ---------------------------------------------------------------------------
def multihead_attention_forward(query, key, value, params, nhead,
                                *, self_attention=False,
                                return_attn_weights=True):
    B, L, E = query.shape
    S = key.shape[1]
    assert E % nhead == 0

    w_in = params["in_proj_weight"]      # (3E, E)
    b_in = params["in_proj_bias"]        # (3E,)
    w_out = params["out_proj_weight"]    # (E, E)
    b_out = params["out_proj_bias"]      # (E,)

    # K-major bf16 weights: MXU RHS is already (K, N); halves weight DMA.
    w_in_t = jnp.transpose(w_in).astype(jnp.bfloat16)    # (E, 3E)
    wo_t = jnp.transpose(w_out).astype(jnp.bfloat16)     # (E, E)

    if self_attention:
        # Single fused QKV projection; Q/K/V are column blocks 0/1/2 of (B,L,3E).
        qkv = linear(query.reshape(B * L, E), w_in_t, b_in).reshape(B, L, 3 * E)
        q_src = k_src = v_src = qkv
        q_blk, k_blk, v_blk = 0, 1, 2
    else:
        q_src = linear(query.reshape(B * L, E), w_in_t[:, :E],
                       b_in[:E]).reshape(B, L, E)
        if key is value:
            # Fused K/V projection; K/V are column blocks 0/1 of (B,S,2E).
            kv = linear(key.reshape(B * S, E), w_in_t[:, E:],
                        b_in[E:]).reshape(B, S, 2 * E)
            k_src = v_src = kv
            k_blk, v_blk = 0, 1
        else:
            k_src = linear(key.reshape(B * S, E), w_in_t[:, E:2 * E],
                           b_in[E:2 * E]).reshape(B, S, E)
            v_src = linear(value.reshape(B * S, E), w_in_t[:, 2 * E:],
                           b_in[2 * E:]).reshape(B, S, E)
            k_blk, v_blk = 0, 0
        q_blk = 0

    return attention(q_src, k_src, v_src, wo_t, b_out, nhead=nhead,
                     q_blk=q_blk, k_blk=k_blk, v_blk=v_blk,
                     need_weights=return_attn_weights)


# ---------------------------------------------------------------------------
# Plain-JAX reference (mirrors the kernels' bf16-boundary / f32-accumulate math)
# ---------------------------------------------------------------------------
def _reference_forward(query, key, value, params, nhead):
    B, L, E = query.shape
    S = key.shape[1]
    dh = E // nhead
    w_in = params["in_proj_weight"]
    b_in = params["in_proj_bias"]
    w_out = params["out_proj_weight"]
    b_out = params["out_proj_bias"]

    def lin(x, w, b):
        y = jax.lax.dot_general(
            x.astype(jnp.bfloat16), w.astype(jnp.bfloat16),
            (((1,), (1,)), ((), ())),
            preferred_element_type=jnp.float32) + b
        return y.astype(jnp.bfloat16)          # kernels store projections bf16

    q = lin(query.reshape(B * L, E), w_in[:E], b_in[:E]).reshape(B, L, nhead, dh)
    k = lin(key.reshape(B * S, E), w_in[E:2 * E], b_in[E:2 * E]).reshape(B, S, nhead, dh)
    v = lin(value.reshape(B * S, E), w_in[2 * E:], b_in[2 * E:]).reshape(B, S, nhead, dh)

    s = jnp.einsum("blhd,bshd->bhls", q, k,
                   preferred_element_type=jnp.float32) / math.sqrt(dh)
    p = jax.nn.softmax(s, axis=-1)
    ctx = jnp.einsum("bhls,bshd->blhd", p.astype(jnp.bfloat16), v,
                     preferred_element_type=jnp.float32)
    out = jax.lax.dot_general(
        ctx.reshape(B * L, E).astype(jnp.bfloat16), w_out.astype(jnp.bfloat16),
        (((1,), (1,)), ((), ())),
        preferred_element_type=jnp.float32) + b_out
    return out.reshape(B, L, E), jnp.mean(p, axis=1)


def init_params(key, d_model):
    k1, k2, _ = jax.random.split(key, 3)
    # Deterministic synthetic init (xavier-uniform-ish scale); not a checkpoint.
    lim = math.sqrt(6.0 / (d_model + d_model))
    return {
        "in_proj_weight": jax.random.uniform(
            k1, (3 * d_model, d_model), jnp.float32, -lim, lim),
        "in_proj_bias": jnp.zeros((3 * d_model,), jnp.float32),
        "out_proj_weight": jax.random.uniform(
            k2, (d_model, d_model), jnp.float32, -lim, lim),
        "out_proj_bias": jnp.zeros((d_model,), jnp.float32),
    }


if __name__ == "__main__":
    B, L, S, E, NHEAD = 2, 8, 16, 128, 4   # E multiple of 128 -> lane-dense blocks

    root = jax.random.PRNGKey(0)
    kx, kk, kv, kp = jax.random.split(root, 4)
    x = jax.random.normal(kx, (B, L, E), dtype=jnp.float32)
    params = init_params(kp, E)

    # --- self-attention path (SepFormer's call pattern) ---
    self_fwd = jax.jit(functools.partial(
        multihead_attention_forward, nhead=NHEAD, self_attention=True))
    out, attn_w = self_fwd(x, x, x, params)
    jax.block_until_ready((out, attn_w))

    assert out.shape == (B, L, E)
    assert attn_w.shape == (B, L, L)
    assert bool(jnp.all(jnp.isfinite(out)))
    assert bool(jnp.allclose(jnp.sum(attn_w, axis=-1), 1.0, atol=1e-3))

    ref_out, ref_attn = _reference_forward(x, x, x, params, NHEAD)
    assert bool(jnp.allclose(out, ref_out, atol=3e-2, rtol=3e-2))
    assert bool(jnp.allclose(attn_w, ref_attn, atol=2e-2, rtol=2e-2))

    # --- need_weights=False fast path (no (B,L,S) writeback) ---
    fast_fwd = jax.jit(functools.partial(
        multihead_attention_forward, nhead=NHEAD, self_attention=True,
        return_attn_weights=False))
    out_fast = fast_fwd(x, x, x, params)
    jax.block_until_ready(out_fast)
    assert bool(jnp.allclose(out_fast, out, atol=1e-3, rtol=1e-3))

    # --- cross-attention path (L != S), separate K/V projections ---
    key_in = jax.random.normal(kk, (B, S, E), dtype=jnp.float32)
    val_in = jax.random.normal(kv, (B, S, E), dtype=jnp.float32)
    cross_fwd = jax.jit(functools.partial(
        multihead_attention_forward, nhead=NHEAD, self_attention=False))
    out_c, attn_c = cross_fwd(x, key_in, val_in, params)
    jax.block_until_ready((out_c, attn_c))
    ref_out_c, ref_attn_c = _reference_forward(x, key_in, val_in, params, NHEAD)
    assert out_c.shape == (B, L, E) and attn_c.shape == (B, L, S)
    assert bool(jnp.allclose(out_c, ref_out_c, atol=3e-2, rtol=3e-2))
    assert bool(jnp.allclose(attn_c, ref_attn_c, atol=2e-2, rtol=2e-2))

    print("KERNEL_OK")
</pallas_src>

<mosaic_0001>
module attributes {stable_mosaic.version = 11 : i64} {
  func.func @_linear_kernel(%arg0: i32, %arg1: memref<16x128xf32, #tpu.memory_space<vmem>>, %arg2: memref<128x384xbf16, #tpu.memory_space<vmem>>, %arg3: memref<1x384xf32, #tpu.memory_space<vmem>>, %arg4: memref<16x384xbf16, #tpu.memory_space<vmem>>) attributes {dimension_semantics = [#tpu.dimension_semantics<parallel>], iteration_bounds = array<i64: 1>, scalar_prefetch = 0 : i64, scratch_operands = 0 : i64, tpu.core_type = #tpu.core_type<tc>, window_params = [{transform_indices = @transform_0, window_bounds = array<i64: 16, 128>}, {pipeline_mode = #tpu.pipeline_mode<synchronous>, transform_indices = @transform_1, window_bounds = array<i64: 128, 384>}, {pipeline_mode = #tpu.pipeline_mode<synchronous>, transform_indices = @transform_2, window_bounds = array<i64: 1, 384>}, {transform_indices = @transform_3, window_bounds = array<i64: 16, 384>}]} {
    %c0 = arith.constant 0 : index
    %c0_0 = arith.constant 0 : index
    %0 = vector.load %arg1[%c0, %c0_0] : memref<16x128xf32, #tpu.memory_space<vmem>>, vector<16x128xf32>
    %1 = arith.truncf %0 : vector<16x128xf32> to vector<16x128xbf16>
    %c0_1 = arith.constant 0 : index
    %c0_2 = arith.constant 0 : index
    %2 = vector.load %arg2[%c0_1, %c0_2] : memref<128x384xbf16, #tpu.memory_space<vmem>>, vector<128x384xbf16>
    %cst = arith.constant dense<0.000000e+00> : vector<16x384xf32>
    %3 = tpu.matmul %1, %2, %cst {dimension_numbers = #tpu.dot_dimension_numbers<[1], [0], [0], [1], [0, 0, 1, 1], [], []>} : vector<16x128xbf16>, vector<128x384xbf16>, vector<16x384xf32> -> vector<16x384xf32>
    %c0_3 = arith.constant 0 : index
    %c0_4 = arith.constant 0 : index
    %4 = vector.load %arg3[%c0_3, %c0_4] : memref<1x384xf32, #tpu.memory_space<vmem>>, vector<1x384xf32>
    %5 = vector.broadcast %4 : vector<1x384xf32> to vector<16x384xf32>
    %6 = arith.addf %3, %5 : vector<16x384xf32>
    %7 = arith.truncf %6 : vector<16x384xf32> to vector<16x384xbf16>
    %c0_5 = arith.constant 0 : index
    %c0_6 = arith.constant 0 : index
    %8 = vector.load %arg4[%c0_5, %c0_6] : memref<16x384xbf16, #tpu.memory_space<vmem>>, vector<16x384xbf16>
    tpu.vector_store %arg4[%c0_5, %c0_6], %7 {strides = array<i32>} : memref<16x384xbf16, #tpu.memory_space<vmem>>, vector<16x384xbf16>,
    return
  }
  func.func @transform_0(%arg0: i32) -> (i32, i32) {
    %c0_i32 = arith.constant 0 : i32
    %c0_i32_0 = arith.constant 0 : i32
    return %arg0, %c0_i32 : i32, i32
  }
  func.func @transform_1(%arg0: i32) -> (i32, i32) {
    %c0_i32 = arith.constant 0 : i32
    %c0_i32_0 = arith.constant 0 : i32
    %c0_i32_1 = arith.constant 0 : i32
    return %c0_i32, %c0_i32_0 : i32, i32
  }
  func.func @transform_2(%arg0: i32) -> (i32, i32) {
    %c0_i32 = arith.constant 0 : i32
    %c0_i32_0 = arith.constant 0 : i32
    %c0_i32_1 = arith.constant 0 : i32
    return %c0_i32, %c0_i32_0 : i32, i32
  }
  func.func @transform_3(%arg0: i32) -> (i32, i32) {
    %c0_i32 = arith.constant 0 : i32
    %c0_i32_0 = arith.constant 0 : i32
    return %arg0, %c0_i32 : i32, i32
  }
}

module attributes {stable_mosaic.version = 11 : i64} {
  func.func @_mha_kernel(%arg0: i32, %arg1: i32, %arg2: memref<1x8x128xbf16, #tpu.memory_space<vmem>>, %arg3: memref<1x8x128xbf16, #tpu.memory_space<vmem>>, %arg4: memref<1x8x128xbf16, #tpu.memory_space<vmem>>, %arg5: memref<128x128xbf16, #tpu.memory_space<vmem>>, %arg6: memref<1x128xf32, #tpu.memory_space<vmem>>, %arg7: memref<1x8x128xf32, #tpu.memory_space<vmem>>, %arg8: memref<1x8x8xf32, #tpu.memory_space<vmem>>) attributes {dimension_semantics = [#tpu.dimension_semantics<parallel>, #tpu.dimension_semantics<parallel>], iteration_bounds = array<i64: 2, 1>, scalar_prefetch = 0 : i64, scratch_operands = 0 : i64, tpu.core_type = #tpu.core_type<tc>, window_params = [{transform_indices = @transform_0, window_bounds = array<i64: 1, 8, 128>}, {transform_indices = @transform_1, window_bounds = array<i64: 1, 8, 128>}, {transform_indices = @transform_2, window_bounds = array<i64: 1, 8, 128>}, {pipeline_mode = #tpu.pipeline_mode<synchronous>, transform_indices = @transform_3, window_bounds = array<i64: 128, 128>}, {pipeline_mode = #tpu.pipeline_mode<synchronous>, transform_indices = @transform_4, window_bounds = array<i64: 1, 128>}, {transform_indices = @transform_5, window_bounds = array<i64: 1, 8, 128>}, {transform_indices = @transform_6, window_bounds = array<i64: 1, 8, 8>}]} {
    %cst = arith.constant 0.000000e+00 : f32
    %0 = vector.broadcast %cst : f32 to vector<8x128xf32>
    %c0 = arith.constant 0 : index
    %c0_0 = arith.constant 0 : index
    %c0_1 = arith.constant 0 : index
    %1 = vector.load %arg7[%c0, %c0_0, %c0_1] : memref<1x8x128xf32, #tpu.memory_space<vmem>>, vector<1x8x128xf32>
    %2 = vector.shape_cast %1 : vector<1x8x128xf32> to vector<8x128xf32>
    %3 = vector.shape_cast %0 : vector<8x128xf32> to vector<1x8x128xf32>
    tpu.vector_store %arg7[%c0, %c0_0, %c0_1], %3 {strides = array<i32>} : memref<1x8x128xf32, #tpu.memory_space<vmem>>, vector<1x8x128xf32>,
    %cst_2 = arith.constant 0.000000e+00 : f32
    %4 = vector.broadcast %cst_2 : f32 to vector<8x8xf32>
    %c0_3 = arith.constant 0 : index
    %c0_4 = arith.constant 0 : index
    %c0_5 = arith.constant 0 : index
    %5 = vector.load %arg8[%c0_3, %c0_4, %c0_5] : memref<1x8x8xf32, #tpu.memory_space<vmem>>, vector<1x8x8xf32>
    %6 = vector.shape_cast %5 : vector<1x8x8xf32> to vector<8x8xf32>
    %7 = vector.shape_cast %4 : vector<8x8xf32> to vector<1x8x8xf32>
    tpu.vector_store %arg8[%c0_3, %c0_4, %c0_5], %7 {strides = array<i32>} : memref<1x8x8xf32, #tpu.memory_space<vmem>>, vector<1x8x8xf32>,
    %c0_6 = arith.constant 0 : index
    %c0_7 = arith.constant 0 : index
    %c0_8 = arith.constant 0 : index
    %8 = vector.load %arg2[%c0_6, %c0_7, %c0_8] : memref<1x8x128xbf16, #tpu.memory_space<vmem>>, vector<1x8x32xbf16>
    %9 = vector.shape_cast %8 : vector<1x8x32xbf16> to vector<8x32xbf16>
    %c0_9 = arith.constant 0 : index
    %c0_10 = arith.constant 0 : index
    %c0_11 = arith.constant 0 : index
    %10 = vector.load %arg3[%c0_9, %c0_10, %c0_11] : memref<1x8x128xbf16, #tpu.memory_space<vmem>>, vector<1x8x32xbf16>
    %11 = vector.shape_cast %10 : vector<1x8x32xbf16> to vector<8x32xbf16>
    %c0_12 = arith.constant 0 : index
    %c0_13 = arith.constant 0 : index
    %c0_14 = arith.constant 0 : index
    %12 = vector.load %arg4[%c0_12, %c0_13, %c0_14] : memref<1x8x128xbf16, #tpu.memory_space<vmem>>, vector<1x8x32xbf16>
    %13 = vector.shape_cast %12 : vector<1x8x32xbf16> to vector<8x32xbf16>
    %cst_15 = arith.constant dense<0.000000e+00> : vector<8x8xf32>
    %14 = tpu.matmul %9, %11, %cst_15 {dimension_numbers = #tpu.dot_dimension_numbers<[1], [1], [0], [0], [0, 0, 1, 0], [], []>} : vector<8x32xbf16>, vector<8x32xbf16>, vector<8x8xf32> -> vector<8x8xf32>
    %cst_16 = arith.constant 0.176776692 : f32
    %15 = vector.broadcast %cst_16 : f32 to vector<8x8xf32>
    %16 = arith.mulf %14, %15 : vector<8x8xf32>
    %cst_17 = arith.constant dense<0xFF800000> : vector<8xf32>
    %17 = vector.multi_reduction <maximumf>, %16, %cst_17 [1] : vector<8x8xf32> to vector<8xf32>
    %18 = vector.shape_cast %17 : vector<8xf32> to vector<8x1xf32>
    %19 = vector.broadcast %18 : vector<8x1xf32> to vector<8x8xf32>
    %20 = arith.subf %16, %19 : vector<8x8xf32>
    %21 = math.exp %20 : vector<8x8xf32>
    %cst_18 = arith.constant dense<0.000000e+00> : vector<8xf32>
    %22 = vector.multi_reduction <add>, %21, %cst_18 [1] : vector<8x8xf32> to vector<8xf32>
    %23 = vector.shape_cast %22 : vector<8xf32> to vector<8x1xf32>
    %24 = tpu.reciprocal %23 : vector<8x1xf32> -> vector<8x1xf32>
    %25 = vector.broadcast %24 : vector<8x1xf32> to vector<8x8xf32>
    %26 = arith.mulf %21, %25 : vector<8x8xf32>
    %27 = arith.truncf %26 : vector<8x8xf32> to vector<8x8xbf16>
    %cst_19 = arith.constant dense<0.000000e+00> : vector<8x32xf32>
    %28 = tpu.matmul %27, %13, %cst_19 {dimension_numbers = #tpu.dot_dimension_numbers<[1], [0], [0], [1], [0, 0, 1, 1], [], []>} : vector<8x8xbf16>, vector<8x32xbf16>, vector<8x32xf32> -> vector<8x32xf32>
    %c0_20 = arith.constant 0 : index
    %c0_21 = arith.constant 0 : index
    %c0_22 = arith.constant 0 : index
    %29 = vector.load %arg7[%c0_20, %c0_21, %c0_22] : memref<1x8x128xf32, #tpu.memory_space<vmem>>, vector<1x8x128xf32>
    %30 = vector.shape_cast %29 : vector<1x8x128xf32> to vector<8x128xf32>
    %31 = arith.truncf %28 : vector<8x32xf32> to vector<8x32xbf16>
    %c0_23 = arith.constant 0 : index
    %c0_24 = arith.constant 0 : index
    %32 = vector.load %arg5[%c0_23, %c0_24] : memref<128x128xbf16, #tpu.memory_space<vmem>>, vector<32x128xbf16>
    %cst_25 = arith.constant dense<0.000000e+00> : vector<8x128xf32>
    %33 = tpu.matmul %31, %32, %cst_25 {dimension_numbers = #tpu.dot_dimension_numbers<[1], [0], [0], [1], [0, 0, 1, 1], [], []>} : vector<8x32xbf16>, vector<32x128xbf16>, vector<8x128xf32> -> vector<8x128xf32>
    %34 = arith.addf %30, %33 : vector<8x128xf32>
    %c0_26 = arith.constant 0 : index
    %c0_27 = arith.constant 0 : index
    %c0_28 = arith.constant 0 : index
    %35 = vector.load %arg7[%c0_26, %c0_27, %c0_28] : memref<1x8x128xf32, #tpu.memory_space<vmem>>, vector<1x8x128xf32>
    %36 = vector.shape_cast %35 : vector<1x8x128xf32> to vector<8x128xf32>
    %37 = vector.shape_cast %34 : vector<8x128xf32> to vector<1x8x128xf32>
    tpu.vector_store %arg7[%c0_26, %c0_27, %c0_28], %37 {strides = array<i32>} : memref<1x8x128xf32, #tpu.memory_space<vmem>>, vector<1x8x128xf32>,
    %c0_29 = arith.constant 0 : index
    %c0_30 = arith.constant 0 : index
    %c0_31 = arith.constant 0 : index
    %38 = vector.load %arg8[%c0_29, %c0_30, %c0_31] : memref<1x8x8xf32, #tpu.memory_space<vmem>>, vector<1x8x8xf32>
    %39 = vector.shape_cast %38 : vector<1x8x8xf32> to vector<8x8xf32>
    %40 = arith.addf %39, %26 : vector<8x8xf32>
    %c0_32 = arith.constant 0 : index
    %c0_33 = arith.constant 0 : index
    %c0_34 = arith.constant 0 : index
    %41 = vector.load %arg8[%c0_32, %c0_33, %c0_34] : memref<1x8x8xf32, #tpu.memory_space<vmem>>, vector<1x8x8xf32>
    %42 = vector.shape_cast %41 : vector<1x8x8xf32> to vector<8x8xf32>
    %43 = vector.shape_cast %40 : vector<8x8xf32> to vector<1x8x8xf32>
    tpu.vector_store %arg8[%c0_32, %c0_33, %c0_34], %43 {strides = array<i32>} : memref<1x8x8xf32, #tpu.memory_space<vmem>>, vector<1x8x8xf32>,
    %c0_35 = arith.constant 0 : index
    %c0_36 = arith.constant 0 : index
    %c32 = arith.constant 32 : index
    %44 = vector.load %arg2[%c0_35, %c0_36, %c32] : memref<1x8x128xbf16, #tpu.memory_space<vmem>>, vector<1x8x32xbf16>
    %45 = vector.shape_cast %44 : vector<1x8x32xbf16> to vector<8x32xbf16>
    %c0_37 = arith.constant 0 : index
    %c0_38 = arith.constant 0 : index
    %c32_39 = arith.constant 32 : index
    %46 = vector.load %arg3[%c0_37, %c0_38, %c32_39] : memref<1x8x128xbf16, #tpu.memory_space<vmem>>, vector<1x8x32xbf16>
    %47 = vector.shape_cast %46 : vector<1x8x32xbf16> to vector<8x32xbf16>
    %c0_40 = arith.constant 0 : index
    %c0_41 = arith.constant 0 : index
    %c32_42 = arith.constant 32 : index
    %48 = vector.load %arg4[%c0_40, %c0_41, %c32_42] : memref<1x8x128xbf16, #tpu.memory_space<vmem>>, vector<1x8x32xbf16>
    %49 = vector.shape_cast %48 : vector<1x8x32xbf16> to vector<8x32xbf16>
    %cst_43 = arith.constant dense<0.000000e+00> : vector<8x8xf32>
    %50 = tpu.matmul %45, %47, %cst_43 {dimension_numbers = #tpu.dot_dimension_numbers<[1], [1], [0], [0], [0, 0, 1, 0], [], []>} : vector<8x32xbf16>, vector<8x32xbf16>, vector<8x8xf32> -> vector<8x8xf32>
    %cst_44 = arith.constant 0.176776692 : f32
    %51 = vector.broadcast %cst_44 : f32 to vector<8x8xf32>
    %52 = arith.mulf %50, %51 : vector<8x8xf32>
    %cst_45 = arith.constant dense<0xFF800000> : vector<8xf32>
    %53 = vector.multi_reduction <maximumf>, %52, %cst_45 [1] : vector<8x8xf32> to vector<8xf32>
    %54 = vector.shape_cast %53 : vector<8xf32> to vector<8x1xf32>
    %55 = vector.broadcast %54 : vector<8x1xf32> to vector<8x8xf32>
    %56 = arith.subf %52, %55 : vector<8x8xf32>
    %57 = math.exp %56 : vector<8x8xf32>
    %cst_46 = arith.constant dense<0.000000e+00> : vector<8xf32>
    %58 = vector.multi_reduction <add>, %57, %cst_46 [1] : vector<8x8xf32> to vector<8xf32>
    %59 = vector.shape_cast %58 : vector<8xf32> to vector<8x1xf32>
    %60 = tpu.reciprocal %59 : vector<8x1xf32> -> vector<8x1xf32>
    %61 = vector.broadcast %60 : vector<8x1xf32> to vector<8x8xf32>
    %62 = arith.mulf %57, %61 : vector<8x8xf32>
    %63 = arith.truncf %62 : vector<8x8xf32> to vector<8x8xbf16>
    %cst_47 = arith.constant dense<0.000000e+00> : vector<8x32xf32>
    %64 = tpu.matmul %63, %49, %cst_47 {dimension_numbers = #tpu.dot_dimension_numbers<[1], [0], [0], [1], [0, 0, 1, 1], [], []>} : vector<8x8xbf16>, vector<8x32xbf16>, vector<8x32xf32> -> vector<8x32xf32>
    %c0_48 = arith.constant 0 : index
    %c0_49 = arith.constant 0 : index
    %c0_50 = arith.constant 0 : index
    %65 = vector.load %arg7[%c0_48, %c0_49, %c0_50] : memref<1x8x128xf32, #tpu.memory_space<vmem>>, vector<1x8x128xf32>
    %66 = vector.shape_cast %65 : vector<1x8x128xf32> to vector<8x128xf32>
    %67 = arith.truncf %64 : vector<8x32xf32> to vector<8x32xbf16>
    %c32_51 = arith.constant 32 : index
    %c0_52 = arith.constant 0 : index
    %68 = vector.load %arg5[%c32_51, %c0_52] : memref<128x128xbf16, #tpu.memory_space<vmem>>, vector<32x128xbf16>
    %cst_53 = arith.constant dense<0.000000e+00> : vector<8x128xf32>
    %69 = tpu.matmul %67, %68, %cst_53 {dimension_numbers = #tpu.dot_dimension_numbers<[1], [0], [0], [1], [0, 0, 1, 1], [], []>} : vector<8x32xbf16>, vector<32x128xbf16>, vector<8x128xf32> -> vector<8x128xf32>
    %70 = arith.addf %66, %69 : vector<8x128xf32>
    %c0_54 = arith.constant 0 : index
    %c0_55 = arith.constant 0 : index
    %c0_56 = arith.constant 0 : index
    %71 = vector.load %arg7[%c0_54, %c0_55, %c0_56] : memref<1x8x128xf32, #tpu.memory_space<vmem>>, vector<1x8x128xf32>
    %72 = vector.shape_cast %71 : vector<1x8x128xf32> to vector<8x128xf32>
    %73 = vector.shape_cast %70 : vector<8x128xf32> to vector<1x8x128xf32>
    tpu.vector_store %arg7[%c0_54, %c0_55, %c0_56], %73 {strides = array<i32>} : memref<1x8x128xf32, #tpu.memory_space<vmem>>, vector<1x8x128xf32>,
    %c0_57 = arith.constant 0 : index
    %c0_58 = arith.constant 0 : index
    %c0_59 = arith.constant 0 : index
    %74 = vector.load %arg8[%c0_57, %c0_58, %c0_59] : memref<1x8x8xf32, #tpu.memory_space<vmem>>, vector<1x8x8xf32>
    %75 = vector.shape_cast %74 : vector<1x8x8xf32> to vector<8x8xf32>
    %76 = arith.addf %75, %62 : vector<8x8xf32>
    %c0_60 = arith.constant 0 : index
    %c0_61 = arith.constant 0 : index
    %c0_62 = arith.constant 0 : index
    %77 = vector.load %arg8[%c0_60, %c0_61, %c0_62] : memref<1x8x8xf32, #tpu.memory_space<vmem>>, vector<1x8x8xf32>
    %78 = vector.shape_cast %77 : vector<1x8x8xf32> to vector<8x8xf32>
    %79 = vector.shape_cast %76 : vector<8x8xf32> to vector<1x8x8xf32>
    tpu.vector_store %arg8[%c0_60, %c0_61, %c0_62], %79 {strides = array<i32>} : memref<1x8x8xf32, #tpu.memory_space<vmem>>, vector<1x8x8xf32>,
    %c0_63 = arith.constant 0 : index
    %c0_64 = arith.constant 0 : index
    %c64 = arith.constant 64 : index
    %80 = vector.load %arg2[%c0_63, %c0_64, %c64] : memref<1x8x128xbf16, #tpu.memory_space<vmem>>, vector<1x8x32xbf16>
    %81 = vector.shape_cast %80 : vector<1x8x32xbf16> to vector<8x32xbf16>
    %c0_65 = arith.constant 0 : index
    %c0_66 = arith.constant 0 : index
    %c64_67 = arith.constant 64 : index
    %82 = vector.load %arg3[%c0_65, %c0_66, %c64_67] : memref<1x8x128xbf16, #tpu.memory_space<vmem>>, vector<1x8x32xbf16>
    %83 = vector.shape_cast %82 : vector<1x8x32xbf16> to vector<8x32xbf16>
    %c0_68 = arith.constant 0 : index
    %c0_69 = arith.constant 0 : index
    %c64_70 = arith.constant 64 : index
    %84 = vector.load %arg4[%c0_68, %c0_69, %c64_70] : memref<1x8x128xbf16, #tpu.memory_space<vmem>>, vector<1x8x32xbf16>
    %85 = vector.shape_cast %84 : vector<1x8x32xbf16> to vector<8x32xbf16>
    %cst_71 = arith.constant dense<0.000000e+00> : vector<8x8xf32>
    %86 = tpu.matmul %81, %83, %cst_71 {dimension_numbers = #tpu.dot_dimension_numbers<[1], [1], [0], [0], [0, 0, 1, 0], [], []>} : vector<8x32xbf16>, vector<8x32xbf16>, vector<8x8xf32> -> vector<8x8xf32>
    %cst_72 = arith.constant 0.176776692 : f32
    %87 = vector.broadcast %cst_72 : f32 to vector<8x8xf32>
    %88 = arith.mulf %86, %87 : vector<8x8xf32>
    %cst_73 = arith.constant dense<0xFF800000> : vector<8xf32>
    %89 = vector.multi_reduction <maximumf>, %88, %cst_73 [1] : vector<8x8xf32> to vector<8xf32>
    %90 = vector.shape_cast %89 : vector<8xf32> to vector<8x1xf32>
    %91 = vector.broadcast %90 : vector<8x1xf32> to vector<8x8xf32>
    %92 = arith.subf %88, %91 : vector<8x8xf32>
    %93 = math.exp %92 : vector<8x8xf32>
    %cst_74 = arith.constant dense<0.000000e+00> : vector<8xf32>
    %94 = vector.multi_reduction <add>, %93, %cst_74 [1] : vector<8x8xf32> to vector<8xf32>
    %95 = vector.shape_cast %94 : vector<8xf32> to vector<8x1xf32>
    %96 = tpu.reciprocal %95 : vector<8x1xf32> -> vector<8x1xf32>
    %97 = vector.broadcast %96 : vector<8x1xf32> to vector<8x8xf32>
    %98 = arith.mulf %93, %97 : vector<8x8xf32>
    %99 = arith.truncf %98 : vector<8x8xf32> to vector<8x8xbf16>
    %cst_75 = arith.constant dense<0.000000e+00> : vector<8x32xf32>
    %100 = tpu.matmul %99, %85, %cst_75 {dimension_numbers = #tpu.dot_dimension_numbers<[1], [0], [0], [1], [0, 0, 1, 1], [], []>} : vector<8x8xbf16>, vector<8x32xbf16>, vector<8x32xf32> -> vector<8x32xf32>
    %c0_76 = arith.constant 0 : index
    %c0_77 = arith.constant 0 : index
    %c0_78 = arith.constant 0 : index
    %101 = vector.load %arg7[%c0_76, %c0_77, %c0_78] : memref<1x8x128xf32, #tpu.memory_space<vmem>>, vector<1x8x128xf32>
    %102 = vector.shape_cast %101 : vector<1x8x128xf32> to vector<8x128xf32>
    %103 = arith.truncf %100 : vector<8x32xf32> to vector<8x32xbf16>
    %c64_79 = arith.constant 64 : index
    %c0_80 = arith.constant 0 : index
    %104 = vector.load %arg5[%c64_79, %c0_80] : memref<128x128xbf16, #tpu.memory_space<vmem>>, vector<32x128xbf16>
    %cst_81 = arith.constant dense<0.000000e+00> : vector<8x128xf32>
    %105 = tpu.matmul %103, %104, %cst_81 {dimension_numbers = #tpu.dot_dimension_numbers<[1], [0], [0], [1], [0, 0, 1, 1], [], []>} : vector<8x32xbf16>, vector<32x128xbf16>, vector<8x128xf32> -> vector<8x128xf32>
    %106 = arith.addf %102, %105 : vector<8x128xf32>
    %c0_82 = arith.constant 0 : index
    %c0_83 = arith.constant 0 : index
    %c0_84 = arith.constant 0 : index
    %107 = vector.load %arg7[%c0_82, %c0_83, %c0_84] : memref<1x8x128xf32, #tpu.memory_space<vmem>>, vector<1x8x128xf32>
    %108 = vector.shape_cast %107 : vector<1x8x128xf32> to vector<8x128xf32>
    %109 = vector.shape_cast %106 : vector<8x128xf32> to vector<1x8x128xf32>
    tpu.vector_store %arg7[%c0_82, %c0_83, %c0_84], %109 {strides = array<i32>} : memref<1x8x128xf32, #tpu.memory_space<vmem>>, vector<1x8x128xf32>,
    %c0_85 = arith.constant 0 : index
    %c0_86 = arith.constant 0 : index
    %c0_87 = arith.constant 0 : index
    %110 = vector.load %arg8[%c0_85, %c0_86, %c0_87] : memref<1x8x8xf32, #tpu.memory_space<vmem>>, vector<1x8x8xf32>
    %111 = vector.shape_cast %110 : vector<1x8x8xf32> to vector<8x8xf32>
    %112 = arith.addf %111, %98 : vector<8x8xf32>
    %c0_88 = arith.constant 0 : index
    %c0_89 = arith.constant 0 : index
    %c0_90 = arith.constant 0 : index
    %113 = vector.load %arg8[%c0_88, %c0_89, %c0_90] : memref<1x8x8xf32, #tpu.memory_space<vmem>>, vector<1x8x8xf32>
    %114 = vector.shape_cast %113 : vector<1x8x8xf32> to vector<8x8xf32>
    %115 = vector.shape_cast %112 : vector<8x8xf32> to vector<1x8x8xf32>
    tpu.vector_store %arg8[%c0_88, %c0_89, %c0_90], %115 {strides = array<i32>} : memref<1x8x8xf32, #tpu.memory_space<vmem>>, vector<1x8x8xf32>,
    %c0_91 = arith.constant 0 : index
    %c0_92 = arith.constant 0 : index
    %c96 = arith.constant 96 : index
    %116 = vector.load %arg2[%c0_91, %c0_92, %c96] : memref<1x8x128xbf16, #tpu.memory_space<vmem>>, vector<1x8x32xbf16>
    %117 = vector.shape_cast %116 : vector<1x8x32xbf16> to vector<8x32xbf16>
    %c0_93 = arith.constant 0 : index
    %c0_94 = arith.constant 0 : index
    %c96_95 = arith.constant 96 : index
    %118 = vector.load %arg3[%c0_93, %c0_94, %c96_95] : memref<1x8x128xbf16, #tpu.memory_space<vmem>>, vector<1x8x32xbf16>
    %119 = vector.shape_cast %118 : vector<1x8x32xbf16> to vector<8x32xbf16>
    %c0_96 = arith.constant 0 : index
    %c0_97 = arith.constant 0 : index
    %c96_98 = arith.constant 96 : index
    %120 = vector.load %arg4[%c0_96, %c0_97, %c96_98] : memref<1x8x128xbf16, #tpu.memory_space<vmem>>, vector<1x8x32xbf16>
    %121 = vector.shape_cast %120 : vector<1x8x32xbf16> to vector<8x32xbf16>
    %cst_99 = arith.constant dense<0.000000e+00> : vector<8x8xf32>
    %122 = tpu.matmul %117, %119, %cst_99 {dimension_numbers = #tpu.dot_dimension_numbers<[1], [1], [0], [0], [0, 0, 1, 0], [], []>} : vector<8x32xbf16>, vector<8x32xbf16>, vector<8x8xf32> -> vector<8x8xf32>
    %cst_100 = arith.constant 0.176776692 : f32
    %123 = vector.broadcast %cst_100 : f32 to vector<8x8xf32>
    %124 = arith.mulf %122, %123 : vector<8x8xf32>
    %cst_101 = arith.constant dense<0xFF800000> : vector<8xf32>
    %125 = vector.multi_reduction <maximumf>, %124, %cst_101 [1] : vector<8x8xf32> to vector<8xf32>
    %126 = vector.shape_cast %125 : vector<8xf32> to vector<8x1xf32>
    %127 = vector.broadcast %126 : vector<8x1xf32> to vector<8x8xf32>
    %128 = arith.subf %124, %127 : vector<8x8xf32>
    %129 = math.exp %128 : vector<8x8xf32>
    %cst_102 = arith.constant dense<0.000000e+00> : vector<8xf32>
    %130 = vector.multi_reduction <add>, %129, %cst_102 [1] : vector<8x8xf32> to vector<8xf32>
    %131 = vector.shape_cast %130 : vector<8xf32> to vector<8x1xf32>
    %132 = tpu.reciprocal %131 : vector<8x1xf32> -> vector<8x1xf32>
    %133 = vector.broadcast %132 : vector<8x1xf32> to vector<8x8xf32>
    %134 = arith.mulf %129, %133 : vector<8x8xf32>
    %135 = arith.truncf %134 : vector<8x8xf32> to vector<8x8xbf16>
    %cst_103 = arith.constant dense<0.000000e+00> : vector<8x32xf32>
    %136 = tpu.matmul %135, %121, %cst_103 {dimension_numbers = #tpu.dot_dimension_numbers<[1], [0], [0], [1], [0, 0, 1, 1], [], []>} : vector<8x8xbf16>, vector<8x32xbf16>, vector<8x32xf32> -> vector<8x32xf32>
    %c0_104 = arith.constant 0 : index
    %c0_105 = arith.constant 0 : index
    %c0_106 = arith.constant 0 : index
    %137 = vector.load %arg7[%c0_104, %c0_105, %c0_106] : memref<1x8x128xf32, #tpu.memory_space<vmem>>, vector<1x8x128xf32>
    %138 = vector.shape_cast %137 : vector<1x8x128xf32> to vector<8x128xf32>
    %139 = arith.truncf %136 : vector<8x32xf32> to vector<8x32xbf16>
    %c96_107 = arith.constant 96 : index
    %c0_108 = arith.constant 0 : index
    %140 = vector.load %arg5[%c96_107, %c0_108] : memref<128x128xbf16, #tpu.memory_space<vmem>>, vector<32x128xbf16>
    %cst_109 = arith.constant dense<0.000000e+00> : vector<8x128xf32>
    %141 = tpu.matmul %139, %140, %cst_109 {dimension_numbers = #tpu.dot_dimension_numbers<[1], [0], [0], [1], [0, 0, 1, 1], [], []>} : vector<8x32xbf16>, vector<32x128xbf16>, vector<8x128xf32> -> vector<8x128xf32>
    %142 = arith.addf %138, %141 : vector<8x128xf32>
    %c0_110 = arith.constant 0 : index
    %c0_111 = arith.constant 0 : index
    %c0_112 = arith.constant 0 : index
    %143 = vector.load %arg7[%c0_110, %c0_111, %c0_112] : memref<1x8x128xf32, #tpu.memory_space<vmem>>, vector<1x8x128xf32>
    %144 = vector.shape_cast %143 : vector<1x8x128xf32> to vector<8x128xf32>
    %145 = vector.shape_cast %142 : vector<8x128xf32> to vector<1x8x128xf32>
    tpu.vector_store %arg7[%c0_110, %c0_111, %c0_112], %145 {strides = array<i32>} : memref<1x8x128xf32, #tpu.memory_space<vmem>>, vector<1x8x128xf32>,
    %c0_113 = arith.constant 0 : index
    %c0_114 = arith.constant 0 : index
    %c0_115 = arith.constant 0 : index
    %146 = vector.load %arg8[%c0_113, %c0_114, %c0_115] : memref<1x8x8xf32, #tpu.memory_space<vmem>>, vector<1x8x8xf32>
    %147 = vector.shape_cast %146 : vector<1x8x8xf32> to vector<8x8xf32>
    %148 = arith.addf %147, %134 : vector<8x8xf32>
    %c0_116 = arith.constant 0 : index
    %c0_117 = arith.constant 0 : index
    %c0_118 = arith.constant 0 : index
    %149 = vector.load %arg8[%c0_116, %c0_117, %c0_118] : memref<1x8x8xf32, #tpu.memory_space<vmem>>, vector<1x8x8xf32>
    %150 = vector.shape_cast %149 : vector<1x8x8xf32> to vector<8x8xf32>
    %151 = vector.shape_cast %148 : vector<8x8xf32> to vector<1x8x8xf32>
    tpu.vector_store %arg8[%c0_116, %c0_117, %c0_118], %151 {strides = array<i32>} : memref<1x8x8xf32, #tpu.memory_space<vmem>>, vector<1x8x8xf32>,
    %c0_119 = arith.constant 0 : index
    %c0_120 = arith.constant 0 : index
    %c0_121 = arith.constant 0 : index
    %152 = vector.load %arg7[%c0_119, %c0_120, %c0_121] : memref<1x8x128xf32, #tpu.memory_space<vmem>>, vector<1x8x128xf32>
    %153 = vector.shape_cast %152 : vector<1x8x128xf32> to vector<8x128xf32>
    %c0_122 = arith.constant 0 : index
    %c0_123 = arith.constant 0 : index
    %154 = vector.load %arg6[%c0_122, %c0_123] : memref<1x128xf32, #tpu.memory_space<vmem>>, vector<1x128xf32>
    %155 = vector.broadcast %154 : vector<1x128xf32> to vector<8x128xf32>
    %156 = arith.addf %153, %155 : vector<8x128xf32>
    %c0_124 = arith.constant 0 : index
    %c0_125 = arith.constant 0 : index
    %c0_126 = arith.constant 0 : index
    %157 = vector.load %arg7[%c0_124, %c0_125, %c0_126] : memref<1x8x128xf32, #tpu.memory_space<vmem>>, vector<1x8x128xf32>
    %158 = vector.shape_cast %157 : vector<1x8x128xf32> to vector<8x128xf32>
    %159 = vector.shape_cast %156 : vector<8x128xf32> to vector<1x8x128xf32>
    tpu.vector_store %arg7[%c0_124, %c0_125, %c0_126], %159 {strides = array<i32>} : memref<1x8x128xf32, #tpu.memory_space<vmem>>, vector<1x8x128xf32>,
    %c0_127 = arith.constant 0 : index
    %c0_128 = arith.constant 0 : index
    %c0_129 = arith.constant 0 : index
    %160 = vector.load %arg8[%c0_127, %c0_128, %c0_129] : memref<1x8x8xf32, #tpu.memory_space<vmem>>, vector<1x8x8xf32>
    %161 = vector.shape_cast %160 : vector<1x8x8xf32> to vector<8x8xf32>
    %cst_130 = arith.constant 2.500000e-01 : f32
    %162 = vector.broadcast %cst_130 : f32 to vector<8x8xf32>
    %163 = arith.mulf %161, %162 : vector<8x8xf32>
    %c0_131 = arith.constant 0 : index
    %c0_132 = arith.constant 0 : index
    %c0_133 = arith.constant 0 : index
    %164 = vector.load %arg8[%c0_131, %c0_132, %c0_133] : memref<1x8x8xf32, #tpu.memory_space<vmem>>, vector<1x8x8xf32>
    %165 = vector.shape_cast %164 : vector<1x8x8xf32> to vector<8x8xf32>
    %166 = vector.shape_cast %163 : vector<8x8xf32> to vector<1x8x8xf32>
    tpu.vector_store %arg8[%c0_131, %c0_132, %c0_133], %166 {strides = array<i32>} : memref<1x8x8xf32, #tpu.memory_space<vmem>>, vector<1x8x8xf32>,
    return
  }
  func.func @transform_0(%arg0: i32, %arg1: i32) -> (i32, i32, i32) {
    %c0_i32 = arith.constant 0 : i32
    %c0_i32_0 = arith.constant 0 : i32
    return %arg0, %arg1, %c0_i32 : i32, i32, i32
  }
  func.func @transform_1(%arg0: i32, %arg1: i32) -> (i32, i32, i32) {
    %c0_i32 = arith.constant 0 : i32
    %c1_i32 = arith.constant 1 : i32
    %c0_i32_0 = arith.constant 0 : i32
    return %arg0, %c0_i32, %c1_i32 : i32, i32, i32
  }
  func.func @transform_2(%arg0: i32, %arg1: i32) -> (i32, i32, i32) {
    %c0_i32 = arith.constant 0 : i32
    %c2_i32 = arith.constant 2 : i32
    %c0_i32_0 = arith.constant 0 : i32
    return %arg0, %c0_i32, %c2_i32 : i32, i32, i32
  }
  func.func @transform_3(%arg0: i32, %arg1: i32) -> (i32, i32) {
    %c0_i32 = arith.constant 0 : i32
    %c0_i32_0 = arith.constant 0 : i32
    %c0_i32_1 = arith.constant 0 : i32
    return %c0_i32, %c0_i32_0 : i32, i32
  }
  func.func @transform_4(%arg0: i32, %arg1: i32) -> (i32, i32) {
    %c0_i32 = arith.constant 0 : i32
    %c0_i32_0 = arith.constant 0 : i32
    %c0_i32_1 = arith.constant 0 : i32
    return %c0_i32, %c0_i32_0 : i32, i32
  }
  func.func @transform_5(%arg0: i32, %arg1: i32) -> (i32, i32, i32) {
    %c0_i32 = arith.constant 0 : i32
    %c0_i32_0 = arith.constant 0 : i32
    return %arg0, %arg1, %c0_i32 : i32, i32, i32
  }
  func.func @transform_6(%arg0: i32, %arg1: i32) -> (i32, i32, i32) {
    %c0_i32 = arith.constant 0 : i32
    %c0_i32_0 = arith.constant 0 : i32
    return %arg0, %arg1, %c0_i32 : i32, i32, i32
  }
}

</mosaic_0001>

<llo_original>
// kernel: multihead_attention_forward.2
$region0: #{multihead_attention_forward.2}
  #allocation0 [shape = 'u32[]', space=smem, size = 0x4, offset = 0x4, fixed_abs, tag = 'smem constant byte address 0x4 - core index']
  #allocation1 [shape = 'u32[144,128]{1,0:T(1,128)}', space=vmem, size = 0x12000, scoped, tag = 'internal scratch']
  %s0 = inlined_call_operand.vmem [shape: f32[16,128], index: 0, kind: input, shape index: {}]
  %s1 = inlined_call_operand.vmem [shape: bf16[128,384], index: 1, kind: input, shape index: {}]
  %s2 = inlined_call_operand.vmem [shape: f32[1,384], index: 2, kind: input, shape index: {}]
  %s3 = inlined_call_operand.vmem [shape: bf16[16,384], index: 3, kind: output, shape index: {}]
  %s4 = sld [smem:[#allocation0]]
  $region22: #{multihead_attention_forward.2} parent=0
    _
  %s6 = ssub.s32 1, %s4
  %s7 = scalar_select 0, %s6, %s4
  // Predicated region
  $region2: #{multihead_attention_forward.2} parent=0 // pred_check
    _
  $region3: #{multihead_attention_forward.2} parent=0 // pred_check_branch
    %9 = sbr.rel (0) target = $region5
  $region4: #{multihead_attention_forward.2} parent=0 // pred_region
    _
  $region5: #{multihead_attention_forward.2} parent=0 // pred_fallthru
    _
  // Predicated region
  $region6: #{multihead_attention_forward.2} parent=0 // pred_check
    _
  $region7: #{multihead_attention_forward.2} parent=0 // pred_check_branch
    %11 = sbr.rel (0) target = $region9
  $region8: #{multihead_attention_forward.2} parent=0 // pred_region
    _
  $region9: #{multihead_attention_forward.2} parent=0 // pred_fallthru
    _
  // Predicated region
  $region10: #{multihead_attention_forward.2} parent=0 // pred_check
    _
  $region11: #{multihead_attention_forward.2} parent=0 // pred_check_branch
    %13 = sbr.rel (0) target = $region13
  $region12: #{multihead_attention_forward.2} parent=0 // pred_region
    _
  $region13: #{multihead_attention_forward.2} parent=0 // pred_fallthru
    _
  %v15 = vld [vmem:[%s0] sm:$0xff]
  %v16 = vld [vmem:[%s0 + $0x8] sm:$0xff]
  %v17 = vpack.c.bf16 %v16, %v15
  %v18 = vld [vmem:[%s1] sm:$0xff]
  %v19 = vld [vmem:[%s1 + $0x8] sm:$0xf]
  %v20 = vld [vmem:[%s1 + $0xc] sm:$0xff]
  %v21 = vld [vmem:[%s1 + $0x14] sm:$0xf]
  %v22 = vld [vmem:[%s1 + $0x18] sm:$0xff]
  %v23 = vld [vmem:[%s1 + $0x20] sm:$0xf]
  %v24 = vld [vmem:[%s1 + $0x24] sm:$0xff]
  %v25 = vld [vmem:[%s1 + $0x2c] sm:$0xf]
  %v26 = vld [vmem:[%s1 + $0x30] sm:$0xff]
  %v27 = vld [vmem:[%s1 + $0x38] sm:$0xf]
  %v28 = vld [vmem:[%s1 + $0x3c] sm:$0xff]
  %v29 = vld [vmem:[%s1 + $0x44] sm:$0xf]
  %v30 = vld [vmem:[%s1 + $0x48] sm:$0xff]
  %v31 = vld [vmem:[%s1 + $0x50] sm:$0xf]
  %v32 = vld [vmem:[%s1 + $0x54] sm:$0xff]
  %v33 = vld [vmem:[%s1 + $0x5c] sm:$0xf]
  %v34 = vld [vmem:[%s1 + $0x60] sm:$0xff]
  %v35 = vld [vmem:[%s1 + $0x68] sm:$0xf]
  %v36 = vld [vmem:[%s1 + $0x6c] sm:$0xff]
  %v37 = vld [vmem:[%s1 + $0x74] sm:$0xf]
  %v38 = vld [vmem:[%s1 + $0x78] sm:$0xff]
  %v39 = vld [vmem:[%s1 + $0x80] sm:$0xf]
  %v40 = vld [vmem:[%s1 + $0x84] sm:$0xff]
  %v41 = vld [vmem:[%s1 + $0x8c] sm:$0xf]
  %v42 = vld [vmem:[%s1 + $0x90] sm:$0xff]
  %v43 = vld [vmem:[%s1 + $0x98] sm:$0xf]
  %v44 = vld [vmem:[%s1 + $0x9c] sm:$0xff]
  %v45 = vld [vmem:[%s1 + $0xa4] sm:$0xf]
  %v46 = vld [vmem:[%s1 + $0xa8] sm:$0xff]
  %v47 = vld [vmem:[%s1 + $0xb0] sm:$0xf]
  %v48 = vld [vmem:[%s1 + $0xb4] sm:$0xff]
  %v49 = vld [vmem:[%s1 + $0xbc] sm:$0xf]
  %v50 = vld [vmem:[%s2] sm:$0x7]
  %v52 = vlaneseq
  %v53 = vshrl.u32 %v52, 7
  %v54 = vsub.s32 0, %v53
  %v55 = vrot.slane %v50, %v54
  %v56 = vlaneseq
  %v57 = vshrl.u32 %v56, 7
  %v58 = vsub.s32 1, %v57
  %v59 = vrot.slane %v50, %v58
  %v60 = vlaneseq
  %v61 = vshrl.u32 %v60, 7
  %v62 = vsub.s32 2, %v61
  %v63 = vrot.slane %v50, %v62
  %v99 = vunpack.c.l.b16 %v18
  %v100 = vunpack.c.h.b16 %v18
  %v101 = vunpack.c.l.b16 %v19
  %v102 = vunpack.c.l.b16 %v20
  %v103 = vunpack.c.h.b16 %v20
  %v104 = vunpack.c.l.b16 %v21
  %v105 = vunpack.c.l.b16 %v22
  %v106 = vunpack.c.h.b16 %v22
  %v107 = vunpack.c.l.b16 %v23
  %v108 = vunpack.c.l.b16 %v24
  %v109 = vunpack.c.h.b16 %v24
  %v110 = vunpack.c.l.b16 %v25
  %v111 = vunpack.c.l.b16 %v26
  %v112 = vunpack.c.h.b16 %v26
  %v113 = vunpack.c.l.b16 %v27
  %v114 = vunpack.c.l.b16 %v28
  %v115 = vunpack.c.h.b16 %v28
  %v116 = vunpack.c.l.b16 %v29
  %v117 = vunpack.c.l.b16 %v30
  %v118 = vunpack.c.h.b16 %v30
  %v119 = vunpack.c.l.b16 %v31
  %v120 = vunpack.c.l.b16 %v32
  %v121 = vunpack.c.h.b16 %v32
  %v122 = vunpack.c.l.b16 %v33
  %v123 = vunpack.c.l.b16 %v34
  %v124 = vunpack.c.h.b16 %v34
  %v125 = vunpack.c.l.b16 %v35
  %v126 = vunpack.c.l.b16 %v36
  %v127 = vunpack.c.h.b16 %v36
  %v128 = vunpack.c.l.b16 %v37
  %v129 = vunpack.c.l.b16 %v38
  %v130 = vunpack.c.h.b16 %v38
  %v131 = vunpack.c.l.b16 %v39
  %v132 = vunpack.c.l.b16 %v40
  %v133 = vunpack.c.h.b16 %v40
  %v134 = vunpack.c.l.b16 %v41
  %v135 = vunpack.c.l.b16 %v42
  %v136 = vunpack.c.h.b16 %v42
  %v137 = vunpack.c.l.b16 %v43
  %v138 = vunpack.c.l.b16 %v44
  %v139 = vunpack.c.h.b16 %v44
  %v140 = vunpack.c.l.b16 %v45
  %v141 = vunpack.c.l.b16 %v46
  %v142 = vunpack.c.h.b16 %v46
  %v143 = vunpack.c.l.b16 %v47
  %v144 = vunpack.c.l.b16 %v48
  %v145 = vunpack.c.h.b16 %v48
  %v146 = vunpack.c.l.b16 %v49
  %v147 = vpack.c.b16 %v102, %v99
  %v148 = vpack.c.b16 %v103, %v100
  %v149 = vpack.c.b16 %v104, %v101
  %v150 = vpack.c.b16 %v108, %v105
  %v151 = vpack.c.b16 %v109, %v106
  %v152 = vpack.c.b16 %v110, %v107
  %v153 = vpack.c.b16 %v114, %v111
  %v154 = vpack.c.b16 %v115, %v112
  %v155 = vpack.c.b16 %v116, %v113
  %v156 = vpack.c.b16 %v120, %v117
  %v157 = vpack.c.b16 %v121, %v118
  %v158 = vpack.c.b16 %v122, %v119
  %v159 = vpack.c.b16 %v126, %v123
  %v160 = vpack.c.b16 %v127, %v124
  %v161 = vpack.c.b16 %v128, %v125
  %v162 = vpack.c.b16 %v132, %v129
  %v163 = vpack.c.b16 %v133, %v130
  %v164 = vpack.c.b16 %v134, %v131
  %v165 = vpack.c.b16 %v138, %v135
  %v166 = vpack.c.b16 %v139, %v136
  %v167 = vpack.c.b16 %v140, %v137
  %v168 = vpack.c.b16 %v144, %v141
  %v169 = vpack.c.b16 %v145, %v142
  %v170 = vpack.c.b16 %v146, %v143
  %195 = vmatprep.subr.bf16.mxu0 %v169
  %196 = vmatpush1.bf16.msra.mxu0 %v168
  %197 = vmatprep.subr.bf16.mxu0 %v166
  %198 = vmatpush1.bf16.msra.mxu0 %v165
  %199 = vmatprep.subr.bf16.mxu0 %v163
  %200 = vmatpush1.bf16.msra.mxu0 %v162
  %201 = vmatprep.subr.bf16.mxu0 %v160
  %202 = vmatpush1.bf16.msra.mxu0 %v159
  %203 = vmatprep.subr.bf16.mxu0 %v157
  %204 = vmatpush1.bf16.msra.mxu0 %v156
  %205 = vmatprep.subr.bf16.mxu0 %v154
  %206 = vmatpush1.bf16.msra.mxu0 %v153
  %207 = vmatprep.subr.bf16.mxu0 %v151
  %208 = vmatpush1.bf16.msra.mxu0 %v150
  %209 = vmatprep.subr.bf16.mxu0 %v148
  %210 = vmatpush1.bf16.msra.mxu0 %v147
  %211 = vmatprep.subr.bf16.mxu0 0
  %212 = vmatpush2.bf16.msra.mxu0 0
  %213 = vmatprep.subr.bf16.mxu0 0
  %214 = vmatpush2.bf16.msra.mxu0 0
  %215 = vmatprep.subr.bf16.mxu0 0
  %216 = vmatpush2.bf16.msra.mxu0 0
  %217 = vmatprep.subr.bf16.mxu0 0
  %218 = vmatpush2.bf16.msra.mxu0 0
  %219 = vmatprep.subr.bf16.mxu0 0
  %220 = vmatpush2.bf16.msra.mxu0 0
  %221 = vmatprep.subr.bf16.mxu0 0
  %222 = vmatpush2.bf16.msra.mxu0 0
  %223 = vmatprep.subr.bf16.mxu0 0
  %224 = vmatpush2.bf16.msra.mxu0 0
  %225 = vmatprep.subr.bf16.mxu0 0
  %226 = vmatpush2.bf16.msra.mxu0 0
  %227 = vmatprep.mubr.bf16.mxu0 0
  %228 = vmatmul.mubr.bf16.gmra.mxu0 %v17
  %v229 = vpop.f32.mrf.mxu0
  %v230 = vadd.f32 %v55, %v229
  %v231 = vpop.f32.mrf.mxu0
  %v232 = vadd.f32 %v59, %v231
  %v233 = vpop.f32.mrf.mxu0
  %v234 = vadd.f32 %v55, %v233
  %v235 = vpop.f32.mrf.mxu0
  %v236 = vadd.f32 %v59, %v235
  %237 = vdwg.mxu0
  %238 = vmatprep.subr.bf16.mxu0 0
  %239 = vmatpush1.bf16.msra.mxu0 %v170
  %240 = vmatprep.subr.bf16.mxu0 0
  %241 = vmatpush1.bf16.msra.mxu0 %v167
  %242 = vmatprep.subr.bf16.mxu0 0
  %243 = vmatpush1.bf16.msra.mxu0 %v164
  %244 = vmatprep.subr.bf16.mxu0 0
  %245 = vmatpush1.bf16.msra.mxu0 %v161
  %246 = vmatprep.subr.bf16.mxu0 0
  %247 = vmatpush1.bf16.msra.mxu0 %v158
  %248 = vmatprep.subr.bf16.mxu0 0
  %249 = vmatpush1.bf16.msra.mxu0 %v155
  %250 = vmatprep.subr.bf16.mxu0 0
  %251 = vmatpush1.bf16.msra.mxu0 %v152
  %252 = vmatprep.subr.bf16.mxu0 0
  %253 = vmatpush1.bf16.msra.mxu0 %v149
  %254 = vmatprep.subr.bf16.mxu0 0
  %255 = vmatpush2.bf16.msra.mxu0 0
  %256 = vmatprep.subr.bf16.mxu0 0
  %257 = vmatpush2.bf16.msra.mxu0 0
  %258 = vmatprep.subr.bf16.mxu0 0
  %259 = vmatpush2.bf16.msra.mxu0 0
  %260 = vmatprep.subr.bf16.mxu0 0
  %261 = vmatpush2.bf16.msra.mxu0 0
  %262 = vmatprep.subr.bf16.mxu0 0
  %263 = vmatpush2.bf16.msra.mxu0 0
  %264 = vmatprep.subr.bf16.mxu0 0
  %265 = vmatpush2.bf16.msra.mxu0 0
  %266 = vmatprep.subr.bf16.mxu0 0
  %267 = vmatpush2.bf16.msra.mxu0 0
  %268 = vmatprep.subr.bf16.mxu0 0
  %269 = vmatpush2.bf16.msra.mxu0 0
  %270 = vmatprep.mubr.bf16.mxu0 0
  %271 = vmatmul.mubr.bf16.gmra.mxu0 %v17
  %v272 = vpop.f32.mrf.mxu0
  %v273 = vadd.f32 %v63, %v272
  %v274 = vpop.f32.mrf.mxu0
  %v275 = vpop.f32.mrf.mxu0
  %v276 = vadd.f32 %v63, %v275
  %v277 = vpop.f32.mrf.mxu0
  %278 = vdwg.mxu0
  %v279 = vpack.c.bf16 %v234, %v230
  %v280 = vpack.c.bf16 %v236, %v232
  %v281 = vpack.c.bf16 %v276, %v273
  %v285 = vunpack.c.l.b16 %v279
  %v286 = vunpack.c.l.b16 %v280
  %v287 = vunpack.c.l.b16 %v281
  %v288 = vunpack.c.h.b16 %v279
  %v289 = vunpack.c.h.b16 %v280
  %v290 = vunpack.c.h.b16 %v281
  %v291 = vpack.c.b16 %v286, %v285
  %v292 = vpack.c.b16 %v287, %v287
  %v293 = vpack.c.b16 %v289, %v288
  %v294 = vpack.c.b16 %v290, %v290
  %299 = vst [vmem:[%s3] sm:$0xff] %v291
  %300 = vst [vmem:[%s3 + $0x8] sm:$0xf] %v292
  %301 = vst [vmem:[%s3 + $0xc] sm:$0xff] %v293
  %302 = vst [vmem:[%s3 + $0x14] sm:$0xf] %v294
  // Predicated region
  $region14: #{multihead_attention_forward.2} parent=0 // pred_check
    _
  $region15: #{multihead_attention_forward.2} parent=0 // pred_check_branch
    %304 = sbr.rel (0) target = $region17
  $region16: #{multihead_attention_forward.2} parent=0 // pred_region
    _
  $region17: #{multihead_attention_forward.2} parent=0 // pred_fallthru
    _
  // Predicated region
  $region18: #{multihead_attention_forward.2} parent=0 // pred_check
    _
  $region19: #{multihead_attention_forward.2} parent=0 // pred_check_branch
    %306 = sbr.rel (0) target = $region21
  $region20: #{multihead_attention_forward.2} parent=0 // pred_region
    _
  $region21: #{multihead_attention_forward.2} parent=0 // pred_fallthru
    _

// kernel: multihead_attention_forward.3
$region0: #{multihead_attention_forward.3}
  #allocation0 [shape = 'u32[]', space=smem, size = 0x4, offset = 0x4, fixed_abs, tag = 'smem constant byte address 0x4 - core index']
  #allocation1 [shape = 'u32[144,128]{1,0:T(1,128)}', space=vmem, size = 0x12000, scoped, tag = 'internal scratch']
  %s0 = inlined_call_operand.vmem [shape: bf16[2,8,384], index: 0, kind: input, shape index: {}, may-alias: {0,1,2}]
  %s1 = inlined_call_operand.vmem [shape: bf16[2,8,384], index: 1, kind: input, shape index: {}, may-alias: {0,1,2}]
  %s2 = inlined_call_operand.vmem [shape: bf16[2,8,384], index: 2, kind: input, shape index: {}, may-alias: {0,1,2}]
  %s3 = inlined_call_operand.vmem [shape: bf16[128,128], index: 3, kind: input, shape index: {}]
  %s4 = inlined_call_operand.vmem [shape: f32[1,128], index: 4, kind: input, shape index: {}]
  %s5 = inlined_call_operand.hbm [shape: f32[2,8,128], index: 5, kind: output, shape index: {0}]
  %s6 = inlined_call_operand.hbm [shape: f32[2,8,8], index: 6, kind: output, shape index: {1}]
  %7 = xla_tuple %s5, %s6
  %s8 = sld [smem:[#allocation0]]
  $region61: #{multihead_attention_forward.3} parent=0
    _
  %s10 = ssub.s32 1, %s8
  %s11 = scalar_select 0, %s10, %s8
  $region1: #{multihead_attention_forward.3} parent=0
    #allocation2 [shape = 'u8[8192]{0}', space=vmem, size = 0x2000, scoped, tag = 'output window, operand 0']
    #allocation3 [shape = 's32[2]{0}', space=sflag, size = 0x8, scoped, tag = 'scoped memory for multihead_attention_forward.3']
    #allocation4 [shape = 'u8[8192]{0}', space=vmem, size = 0x2000, scoped, tag = 'output window, operand 1']
    #allocation5 [shape = 's32[2]{0}', space=sflag, size = 0x8, scoped, tag = 'scoped memory for multihead_attention_forward.3']
    %12 = vsyncpa [#allocation3], 0
    %s13 = scalar_lea.sflag [#allocation3], 1
    %14 = vsyncpa %s13, 0
    %15 = vsyncpa [#allocation5], 0
    %s16 = scalar_lea.sflag [#allocation5], 1
    %17 = vsyncpa %s16, 0
    loop: start=0, step=1, limit=4
    $region2: #{multihead_attention_forward.3} parent=1 // loop_pre_header
      _
    $region3: #{multihead_attention_forward.3} parent=1 // loop_header
      %s19 = sphi 0, %s23
      %p20 = scmp.ge.s32.totalorder %s19, 4
      %s26 = sphi 0, %s38
      %s27 = sphi 0, %s34
      %s28 = sphi 0, %s26
      %s29 = sphi 0, %s27
      %s30 = sphi 0, %s28
      %s31 = sphi 0, %s29
      %s43 = sphi 0, %s45
      %s46 = sphi 0, %s43
      %s47 = sphi 0, %s46
      %s63 = sphi 0, %s47
      %s69 = sphi 0, %s71
      %s72 = sphi 0, %s69
      %s73 = sphi 0, %s72
      %s89 = sphi 0, %s73
      %s95 = sphi 0, %s97
      %s98 = sphi 0, %s95
      %s99 = sphi 0, %s98
      %s115 = sphi 0, %s99
      %s119 = sphi 0, %s119
      %s121 = sphi 0, %s119
      %s122 = sphi 0, %s121
      %s136 = sphi 0, %s122
      %s140 = sphi 0, %s140
      %s142 = sphi 0, %s140
      %s143 = sphi 0, %s142
      %s157 = sphi 0, %s143
      %s165 = sphi 0, %s167
      %s168 = sphi 0, %s165
      %s169 = sphi 0, %s168
      %s185 = sphi 0, %s169
      %s193 = sphi 0, %s195
      %s196 = sphi 0, %s193
      %s197 = sphi 0, %s196
      %s213 = sphi 0, %s197
    $region4: #{multihead_attention_forward.3} parent=1 // loop_header_branch
      %22 = sbr.rel (%p20) target = $region8
    $region5: #{multihead_attention_forward.3} parent=1 // loop_body
      %s24 = ssub.s32 %s19, 1
      %s25 = ssub.s32 %s19, 2
      %s32 = sadd.s32 1, %s27
      %p33 = scmp.ge.s32.totalorder %s32, 1
      %s34 = scalar_select %p33, 0, %s32
      %s35 = sadd.s32 1, %s26
      %s36 = scalar_select %p33, %s35, %s26
      %p37 = scmp.ge.s32.totalorder %s36, 2
      %s38 = scalar_select %p37, 0, %s36
      %s39 = ssub.s32 %s26, %s38
      %s40 = ssub.s32 %s27, %s34
      %s41 = sor.u32 %s39, %s40
      %p42 = scmp.eq.s32.totalorder %s41, 0
      %s44 = sadd.s32 %s43, 1
      %s45 = scalar_select %p42, %s43, %s44
      %p48 = pneg %p42
      %p49 = scmp.eq.s32.totalorder %s19, 1
      %p50 = por %p48, %p49
      %p51 = scmp.ne.s32.totalorder %s43, %s46
      %p52 = scmp.eq.s32.totalorder %s19, 0
      %p53 = por %p51, %p52
      %p54 = scmp.ne.s32.totalorder %s43, %s46
      %p55 = scmp.eq.s32.totalorder %s24, 1
      %p56 = por %p54, %p55
      %p57 = scmp.ne.s32.totalorder %s46, %s47
      %p58 = scmp.eq.s32.totalorder %s24, 0
      %p59 = por %p57, %p58
      %p60 = scmp.ne.s32.totalorder %s46, %s47
      %p61 = scmp.eq.s32.totalorder %s25, 1
      %p62 = por %p60, %p61
      %p64 = scmp.ne.s32.totalorder %s47, %s63
      %p65 = scmp.eq.s32.totalorder %s25, 0
      %p66 = por %p64, %p65
      %s67 = ssub.s32 %s26, %s38
      %p68 = scmp.eq.s32.totalorder %s67, 0
      %s70 = sadd.s32 %s69, 1
      %s71 = scalar_select %p68, %s69, %s70
      %p74 = pneg %p68
      %p75 = scmp.eq.s32.totalorder %s19, 1
      %p76 = por %p74, %p75
      %p77 = scmp.ne.s32.totalorder %s69, %s72
      %p78 = scmp.eq.s32.totalorder %s19, 0
      %p79 = por %p77, %p78
      %p80 = scmp.ne.s32.totalorder %s69, %s72
      %p81 = scmp.eq.s32.totalorder %s24, 1
      %p82 = por %p80, %p81
      %p83 = scmp.ne.s32.totalorder %s72, %s73
      %p84 = scmp.eq.s32.totalorder %s24, 0
      %p85 = por %p83, %p84
      %p86 = scmp.ne.s32.totalorder %s72, %s73
      %p87 = scmp.eq.s32.totalorder %s25, 1
      %p88 = por %p86, %p87
      %p90 = scmp.ne.s32.totalorder %s73, %s89
      %p91 = scmp.eq.s32.totalorder %s25, 0
      %p92 = por %p90, %p91
      %s93 = ssub.s32 %s26, %s38
      %p94 = scmp.eq.s32.totalorder %s93, 0
      %s96 = sadd.s32 %s95, 1
      %s97 = scalar_select %p94, %s95, %s96
      %p100 = pneg %p94
      %p101 = scmp.eq.s32.totalorder %s19, 1
      %p102 = por %p100, %p101
      %p103 = scmp.ne.s32.totalorder %s95, %s98
      %p104 = scmp.eq.s32.totalorder %s19, 0
      %p105 = por %p103, %p104
      %p106 = scmp.ne.s32.totalorder %s95, %s98
      %p107 = scmp.eq.s32.totalorder %s24, 1
      %p108 = por %p106, %p107
      %p109 = scmp.ne.s32.totalorder %s98, %s99
      %p110 = scmp.eq.s32.totalorder %s24, 0
      %p111 = por %p109, %p110
      %p112 = scmp.ne.s32.totalorder %s98, %s99
      %p113 = scmp.eq.s32.totalorder %s25, 1
      %p114 = por %p112, %p113
      %p116 = scmp.ne.s32.totalorder %s99, %s115
      %p117 = scmp.eq.s32.totalorder %s25, 0
      %p118 = por %p116, %p117
      %s120 = sadd.s32 %s119, 1
      %p123 = scmp.eq.s32.totalorder %s19, 1
      %p124 = scmp.ne.s32.totalorder %s119, %s121
      %p125 = scmp.eq.s32.totalorder %s19, 0
      %p126 = por %p124, %p125
      %p127 = scmp.ne.s32.totalorder %s119, %s121
      %p128 = scmp.eq.s32.totalorder %s24, 1
      %p129 = por %p127, %p128
      %p130 = scmp.ne.s32.totalorder %s121, %s122
      %p131 = scmp.eq.s32.totalorder %s24, 0
      %p132 = por %p130, %p131
      %p133 = scmp.ne.s32.totalorder %s121, %s122
      %p134 = scmp.eq.s32.totalorder %s25, 1
      %p135 = por %p133, %p134
      %p137 = scmp.ne.s32.totalorder %s122, %s136
      %p138 = scmp.eq.s32.totalorder %s25, 0
      %p139 = por %p137, %p138
      %s141 = sadd.s32 %s140, 1
      %p144 = scmp.eq.s32.totalorder %s19, 1
      %p145 = scmp.ne.s32.totalorder %s140, %s142
      %p146 = scmp.eq.s32.totalorder %s19, 0
      %p147 = por %p145, %p146
      %p148 = scmp.ne.s32.totalorder %s140, %s142
      %p149 = scmp.eq.s32.totalorder %s24, 1
      %p150 = por %p148, %p149
      %p151 = scmp.ne.s32.totalorder %s142, %s143
      %p152 = scmp.eq.s32.totalorder %s24, 0
      %p153 = por %p151, %p152
      %p154 = scmp.ne.s32.totalorder %s142, %s143
      %p155 = scmp.eq.s32.totalorder %s25, 1
      %p156 = por %p154, %p155
      %p158 = scmp.ne.s32.totalorder %s143, %s157
      %p159 = scmp.eq.s32.totalorder %s25, 0
      %p160 = por %p158, %p159
      %s161 = ssub.s32 %s26, %s38
      %s162 = ssub.s32 %s27, %s34
      %s163 = sor.u32 %s161, %s162
      %p164 = scmp.eq.s32.totalorder %s163, 0
      %s166 = sadd.s32 %s165, 1
      %s167 = scalar_select %p164, %s165, %s166
      %p170 = pneg %p164
      %p171 = scmp.eq.s32.totalorder %s19, 1
      %p172 = por %p170, %p171
      %p173 = scmp.ne.s32.totalorder %s165, %s168
      %p174 = scmp.eq.s32.totalorder %s19, 0
      %p175 = por %p173, %p174
      %p176 = scmp.ne.s32.totalorder %s165, %s168
      %p177 = scmp.eq.s32.totalorder %s24, 1
      %p178 = por %p176, %p177
      %p179 = scmp.ne.s32.totalorder %s168, %s169
      %p180 = scmp.eq.s32.totalorder %s24, 0
      %p181 = por %p179, %p180
      %p182 = scmp.ne.s32.totalorder %s168, %s169
      %p183 = scmp.eq.s32.totalorder %s25, 1
      %p184 = por %p182, %p183
      %p186 = scmp.ne.s32.totalorder %s169, %s185
      %p187 = scmp.eq.s32.totalorder %s25, 0
      %p188 = por %p186, %p187
      %s189 = ssub.s32 %s26, %s38
      %s190 = ssub.s32 %s27, %s34
      %s191 = sor.u32 %s189, %s190
      %p192 = scmp.eq.s32.totalorder %s191, 0
      %s194 = sadd.s32 %s193, 1
      %s195 = scalar_select %p192, %s193, %s194
      %p198 = pneg %p192
      %p199 = scmp.eq.s32.totalorder %s19, 1
      %p200 = por %p198, %p199
      %p201 = scmp.ne.s32.totalorder %s193, %s196
      %p202 = scmp.eq.s32.totalorder %s19, 0
      %p203 = por %p201, %p202
      %p204 = scmp.ne.s32.totalorder %s193, %s196
      %p205 = scmp.eq.s32.totalorder %s24, 1
      %p206 = por %p204, %p205
      %p207 = scmp.ne.s32.totalorder %s196, %s197
      %p208 = scmp.eq.s32.totalorder %s24, 0
      %p209 = por %p207, %p208
      %p210 = scmp.ne.s32.totalorder %s196, %s197
      %p211 = scmp.eq.s32.totalorder %s25, 1
      %p212 = por %p210, %p211
      %p214 = scmp.ne.s32.totalorder %s197, %s213
      %p215 = scmp.eq.s32.totalorder %s25, 0
      %p216 = por %p214, %p215
      %p217 = scmp.le.s32.totalorder 1, %s19
      %p218 = scmp.lt.s32.totalorder %s19, 3
      %p219 = pnand %p217, %p218
      %p220 = pneg %p219
      // Predicated region
      $region9: #{multihead_attention_forward.3} parent=5 // pred_check
        _
      $region10: #{multihead_attention_forward.3} parent=5 // pred_check_branch
        %222 = sbr.rel (%p219) target = $region12
      $region11: #{multihead_attention_forward.3} parent=5 // pred_region
        %s223 = ssub.s32 %s19, 1
        // Predicated region
        $region13: #{multihead_attention_forward.3} parent=11 // pred_check
          %p224 = pneg %p132
        $region14: #{multihead_attention_forward.3} parent=11 // pred_check_branch
          %226 = sbr.rel (%p224) target = $region16
        $region15: #{multihead_attention_forward.3} parent=11 // pred_region
          _
        $region16: #{multihead_attention_forward.3} parent=11 // pred_fallthru
          _
        // Predicated region
        $region17: #{multihead_attention_forward.3} parent=11 // pred_check
          %p227 = pneg %p153
        $region18: #{multihead_attention_forward.3} parent=11 // pred_check_branch
          %229 = sbr.rel (%p227) target = $region20
        $region19: #{multihead_attention_forward.3} parent=11 // pred_region
          _
        $region20: #{multihead_attention_forward.3} parent=11 // pred_fallthru
          _
      $region12: #{multihead_attention_forward.3} parent=5 // pred_fallthru
        _
      %p230 = scmp.lt.s32.totalorder %s19, 2
      // Predicated region
      $region21: #{multihead_attention_forward.3} parent=5 // pred_check
        %p231 = pneg %p230
      $region22: #{multihead_attention_forward.3} parent=5 // pred_check_branch
        %233 = sbr.rel (%p231) target = $region24
      $region23: #{multihead_attention_forward.3} parent=5 // pred_region
        // Predicated region
        $region25: #{multihead_attention_forward.3} parent=23 // pred_check
          %p234 = pneg %p53
        $region26: #{multihead_attention_forward.3} parent=23 // pred_check_branch
          %236 = sbr.rel (%p234) target = $region28
        $region27: #{multihead_attention_forward.3} parent=23 // pred_region
          %p237 = scmp.lt.s32.totalorder %s26, 1
          %s238 = scalar_select %p237, %s26, 1
          %p239 = scmp.lt.s32.totalorder %s27, 0
          %s240 = scalar_select %p239, %s27, 0
          %s241 = smul.addr %s240, 3
          %s242 = smul.addr %s238, 3
          %s243 = sadd.s32 %s241, %s242
          %s244 = smul.addr %s243, 4
          %s245 = scalar_lea.vmem %s0, %s244
        $region28: #{multihead_attention_forward.3} parent=23 // pred_fallthru
          _
        // Predicated region
        $region29: #{multihead_attention_forward.3} parent=23 // pred_check
          %p246 = pneg %p79
        $region30: #{multihead_attention_forward.3} parent=23 // pred_check_branch
          %248 = sbr.rel (%p246) target = $region32
        $region31: #{multihead_attention_forward.3} parent=23 // pred_region
          %p249 = scmp.lt.s32.totalorder %s26, 1
          %s250 = scalar_select %p249, %s26, 1
          %s251 = smul.addr %s250, 3
          %s252 = sadd.s32 1, %s251
          %s253 = smul.addr %s252, 4
          %s254 = scalar_lea.vmem %s1, %s253
        $region32: #{multihead_attention_forward.3} parent=23 // pred_fallthru
          _
        // Predicated region
        $region33: #{multihead_attention_forward.3} parent=23 // pred_check
          %p255 = pneg %p105
        $region34: #{multihead_attention_forward.3} parent=23 // pred_check_branch
          %257 = sbr.rel (%p255) target = $region36
        $region35: #{multihead_attention_forward.3} parent=23 // pred_region
          %p258 = scmp.lt.s32.totalorder %s26, 1
          %s259 = scalar_select %p258, %s26, 1
          %s260 = smul.addr %s259, 3
          %s261 = sadd.s32 2, %s260
          %s262 = smul.addr %s261, 4
          %s263 = scalar_lea.vmem %s2, %s262
        $region36: #{multihead_attention_forward.3} parent=23 // pred_fallthru
          _
      $region24: #{multihead_attention_forward.3} parent=5 // pred_fallthru
        _
      %p264 = scmp.le.s32.totalorder 1, %s19
      %p265 = scmp.lt.s32.totalorder %s19, 3
      %p266 = pnand %p264, %p265
      %p267 = pneg %p266
      // Predicated region
      $region37: #{multihead_attention_forward.3} parent=5 // pred_check
        _
      $region38: #{multihead_attention_forward.3} parent=5 // pred_check_branch
        %269 = sbr.rel (%p266) target = $region40
      $region39: #{multihead_attention_forward.3} parent=5 // pred_region
        %s270 = ssub.s32 %s19, 1
        %p271 = scmp.lt.s32.totalorder %s28, 1
        %s272 = scalar_select %p271, %s28, 1
        %p273 = scmp.lt.s32.totalorder %s29, 0
        %s274 = scalar_select %p273, %s29, 0
        %s275 = smul.addr %s274, 3
        %s276 = smul.addr %s272, 3
        %s277 = sadd.s32 %s275, %s276
        %s278 = smul.addr %s277, 4
        %s279 = scalar_lea.vmem %s0, %s278
        %p280 = pneg %p59
        %p281 = pneg %p56
        %p282 = scmp.lt.s32.totalorder %s28, 1
        %s283 = scalar_select %p282, %s28, 1
        %s284 = smul.addr %s283, 3
        %s285 = sadd.s32 1, %s284
        %s286 = smul.addr %s285, 4
        %s287 = scalar_lea.vmem %s1, %s286
        %p288 = pneg %p85
        %p289 = pneg %p82
        %p290 = scmp.lt.s32.totalorder %s28, 1
        %s291 = scalar_select %p290, %s28, 1
        %s292 = smul.addr %s291, 3
        %s293 = sadd.s32 2, %s292
        %s294 = smul.addr %s293, 4
        %s295 = scalar_lea.vmem %s2, %s294
        %p296 = pneg %p111
        %p297 = pneg %p108
        %p298 = pneg %p132
        %p299 = pneg %p129
        %p300 = pneg %p153
        %p301 = pneg %p150
        %p302 = pneg %p181
        %p303 = pneg %p178
        %s304 = sand.u32 %s168, 1
        %s305 = scalar_lea.sflag [#allocation3], %s304
        %s306 = sand.u32 %s168, 1
        %s307 = smul.addr %s306, 8
        %s308 = scalar_lea.vmem [#allocation2], %s307
        %p309 = pneg %p209
        %p310 = pneg %p206
        %s311 = sand.u32 %s196, 1
        %s312 = scalar_lea.sflag [#allocation5], %s311
        %s313 = sand.u32 %s196, 1
        %s314 = smul.addr %s313, 8
        %s315 = scalar_lea.vmem [#allocation4], %s314
        %p316 = scmp.lt.s32.totalorder %s28, 1
        %s317 = scalar_select %p316, %s28, 1
        %p318 = scmp.lt.s32.totalorder %s29, 0
        %s319 = scalar_select %p318, %s29, 0
        %s320 = smul.addr %s319, 3
        %s321 = smul.addr %s317, 3
        %s322 = sadd.s32 %s320, %s321
        %s323 = smul.addr %s322, 4
        %s324 = scalar_lea.vmem %s0, %s323
        %p325 = scmp.lt.s32.totalorder %s28, 1
        %s326 = scalar_select %p325, %s28, 1
        %s327 = smul.addr %s326, 3
        %s328 = sadd.s32 1, %s327
        %s329 = smul.addr %s328, 4
        %s330 = scalar_lea.vmem %s1, %s329
        %p331 = scmp.lt.s32.totalorder %s28, 1
        %s332 = scalar_select %p331, %s28, 1
        %s333 = smul.addr %s332, 3
        %s334 = sadd.s32 2, %s333
        %s335 = smul.addr %s334, 4
        %s336 = scalar_lea.vmem %s2, %s335
        %338 = vst [vmem:[%s308] sm:$0xff] 0.0
        %vm339 = vcmask 64512
        %340 = vst.msk [vmem:[%s315] sm:$0xff] %vm339, 0.0
        %v341 = vld [vmem:[%s324] sm:$0xf]
        %v342 = vld [vmem:[%s330] sm:$0xf]
        %v343 = vld [vmem:[%s336] sm:$0xf]
        %vm344 = vcmask 261120
        %v346 = vsel %vm344, %v341, 0
        %v349 = vsel %vm344, %v342, 0
        %351 = vmatprep.subr.bf16.mxu0 0
        %352 = vmatpush1.bf16.xpose.msra.mxu0 0
        %353 = vmatprep.subr.bf16.mxu0 0
        %354 = vmatpush1.bf16.xpose.msra.mxu0 0
        %355 = vmatprep.subr.bf16.mxu0 0
        %356 = vmatpush1.bf16.xpose.msra.mxu0 0
        %357 = vmatprep.subr.bf16.mxu0 0
        %358 = vmatpush1.bf16.xpose.msra.mxu0 0
        %359 = vmatprep.subr.bf16.mxu0 0
        %360 = vmatpush1.bf16.xpose.msra.mxu0 0
        %361 = vmatprep.subr.bf16.mxu0 0
        %362 = vmatpush1.bf16.xpose.msra.mxu0 0
        %363 = vmatprep.subr.bf16.mxu0 0
        %364 = vmatpush1.bf16.xpose.msra.mxu0 0
        %365 = vmatprep.subr.bf16.mxu0 0
        %366 = vmatpush1.bf16.xpose.msra.mxu0 %v349
        %367 = vmatprep.subr.bf16.mxu0 0
        %368 = vmatpush2.bf16.xpose.msra.mxu0 0
        %369 = vmatprep.subr.bf16.mxu0 0
        %370 = vmatpush2.bf16.xpose.msra.mxu0 0
        %371 = vmatprep.subr.bf16.mxu0 0
        %372 = vmatpush2.bf16.xpose.msra.mxu0 0
        %373 = vmatprep.subr.bf16.mxu0 0
        %374 = vmatpush2.bf16.xpose.msra.mxu0 0
        %375 = vmatprep.subr.bf16.mxu0 0
        %376 = vmatpush2.bf16.xpose.msra.mxu0 0
        %377 = vmatprep.subr.bf16.mxu0 0
        %378 = vmatpush2.bf16.xpose.msra.mxu0 0
        %379 = vmatprep.subr.bf16.mxu0 0
        %380 = vmatpush2.bf16.xpose.msra.mxu0 0
        %381 = vmatprep.subr.bf16.mxu0 0
        %382 = vmatpush2.bf16.xpose.msra.mxu0 0
        %383 = vmatprep.mubr.bf16.mxu0 0
        %384 = vmatmul.mubr.bf16.gmra.mxu0 %v346
        %v385 = vpop.f32.mrf.mxu0
        %v386 = vadd.f32 0.0, %v385
        %v387 = vpop.f32.mrf.mxu0
        %v388 = vpop.f32.mrf.mxu0
        %v389 = vpop.f32.mrf.mxu0
        %390 = vdwg.mxu0
        %v391 = vmul.f32 %v386, 0.17677669
        %v392 = vsel %vm339, %v391, -inf
        %393 = vmax.xlane.f32.xlu0 %v392
        %v394 = vpop.xlane.xlu0 %393
        %v395 = vsub.f32 %v391, %v394
        %v396 = vmul.f32 %v395, 1.442695
        %v397 = vpow.pop %v396
        %v398 = vsel %vm339, %v397, 0.0
        %399 = vadd.xlane.f32.xlu0 %v398
        %v400 = vpop.xlane.xlu0 %399
        %v401 = vrcp.pop %v400
        %v402 = vmul.f32 %v397, %v401
        %v403 = vpack.c.bf16 %v402, %v402
        %v405 = vsel %vm339, %v403, 0
        %vm407 = vcmask 1043456
        %v409 = vsel %vm407, %v343, 0
        %411 = vmatprep.subr.bf16.mxu0 0
        %412 = vmatpush1.bf16.msra.mxu0 0
        %413 = vmatprep.subr.bf16.mxu0 0
        %414 = vmatpush1.bf16.msra.mxu0 0
        %415 = vmatprep.subr.bf16.mxu0 0
        %416 = vmatpush1.bf16.msra.mxu0 0
        %417 = vmatprep.subr.bf16.mxu0 0
        %418 = vmatpush1.bf16.msra.mxu0 0
        %419 = vmatprep.subr.bf16.mxu0 0
        %420 = vmatpush1.bf16.msra.mxu0 0
        %421 = vmatprep.subr.bf16.mxu0 0
        %422 = vmatpush1.bf16.msra.mxu0 0
        %423 = vmatprep.subr.bf16.mxu0 0
        %424 = vmatpush1.bf16.msra.mxu0 0
        %425 = vmatprep.subr.bf16.mxu0 0
        %426 = vmatpush1.bf16.msra.mxu0 %v409
        %427 = vmatprep.subr.bf16.mxu0 0
        %428 = vmatpush2.bf16.msra.mxu0 0
        %429 = vmatprep.subr.bf16.mxu0 0
        %430 = vmatpush2.bf16.msra.mxu0 0
        %431 = vmatprep.subr.bf16.mxu0 0
        %432 = vmatpush2.bf16.msra.mxu0 0
        %433 = vmatprep.subr.bf16.mxu0 0
        %434 = vmatpush2.bf16.msra.mxu0 0
        %435 = vmatprep.subr.bf16.mxu0 0
        %436 = vmatpush2.bf16.msra.mxu0 0
        %437 = vmatprep.subr.bf16.mxu0 0
        %438 = vmatpush2.bf16.msra.mxu0 0
        %439 = vmatprep.subr.bf16.mxu0 0
        %440 = vmatpush2.bf16.msra.mxu0 0
        %441 = vmatprep.subr.bf16.mxu0 0
        %442 = vmatpush2.bf16.msra.mxu0 0
        %443 = vmatprep.mubr.bf16.mxu0 0
        %444 = vmatmul.mubr.bf16.gmra.mxu0 %v405
        %v445 = vpop.f32.mrf.mxu0
        %v446 = vadd.f32 0.0, %v445
        %v447 = vpop.f32.mrf.mxu0
        %v448 = vpop.f32.mrf.mxu0
        %v449 = vpop.f32.mrf.mxu0
        %450 = vdwg.mxu0
        %v451 = vld [vmem:[%s308] sm:$0xff]
        %v452 = vpack.c.bf16 %v446, %v446
        %v453 = vld [vmem:[%s3] sm:$0xf]
        %v454 = vld [vmem:[%s3 + $0x4] sm:$0xf]
        %v455 = vld [vmem:[%s3 + $0x8] sm:$0xf]
        %v456 = vld [vmem:[%s3 + $0xc] sm:$0xf]
        %v461 = vunpack.c.l.b16 %v453
        %v462 = vunpack.c.l.b16 %v454
        %v463 = vunpack.c.l.b16 %v455
        %v464 = vunpack.c.l.b16 %v456
        %v465 = vpack.c.b16 %v462, %v461
        %v466 = vpack.c.b16 %v464, %v463
        %v470 = vsel %vm344, %v452, 0
        %472 = vmatprep.subr.bf16.mxu0 0
        %473 = vmatpush1.bf16.msra.mxu0 0
        %474 = vmatprep.subr.bf16.mxu0 0
        %475 = vmatpush1.bf16.msra.mxu0 0
        %476 = vmatprep.subr.bf16.mxu0 0
        %477 = vmatpush1.bf16.msra.mxu0 0
        %478 = vmatprep.subr.bf16.mxu0 0
        %479 = vmatpush1.bf16.msra.mxu0 0
        %480 = vmatprep.subr.bf16.mxu0 0
        %481 = vmatpush1.bf16.msra.mxu0 0
        %482 = vmatprep.subr.bf16.mxu0 0
        %483 = vmatpush1.bf16.msra.mxu0 0
        %484 = vmatprep.subr.bf16.mxu0 0
        %485 = vmatpush1.bf16.msra.mxu0 %v466
        %486 = vmatprep.subr.bf16.mxu0 0
        %487 = vmatpush1.bf16.msra.mxu0 %v465
        %488 = vmatprep.subr.bf16.mxu0 0
        %489 = vmatpush2.bf16.msra.mxu0 0
        %490 = vmatprep.subr.bf16.mxu0 0
        %491 = vmatpush2.bf16.msra.mxu0 0
        %492 = vmatprep.subr.bf16.mxu0 0
        %493 = vmatpush2.bf16.msra.mxu0 0
        %494 = vmatprep.subr.bf16.mxu0 0
        %495 = vmatpush2.bf16.msra.mxu0 0
        %496 = vmatprep.subr.bf16.mxu0 0
        %497 = vmatpush2.bf16.msra.mxu0 0
        %498 = vmatprep.subr.bf16.mxu0 0
        %499 = vmatpush2.bf16.msra.mxu0 0
        %500 = vmatprep.subr.bf16.mxu0 0
        %501 = vmatpush2.bf16.msra.mxu0 0
        %502 = vmatprep.subr.bf16.mxu0 0
        %503 = vmatpush2.bf16.msra.mxu0 0
        %504 = vmatprep.mubr.bf16.mxu0 0
        %505 = vmatmul.mubr.bf16.gmra.mxu0 %v470
        %v506 = vpop.f32.mrf.mxu0
        %v507 = vadd.f32 0.0, %v506
        %v508 = vpop.f32.mrf.mxu0
        %v509 = vpop.f32.mrf.mxu0
        %v510 = vpop.f32.mrf.mxu0
        %511 = vdwg.mxu0
        %v512 = vadd.f32 %v451, %v507
        %513 = vst [vmem:[%s308] sm:$0xff] %v512
        %v514 = vld [vmem:[%s315] sm:$0xff]
        %v515 = vadd.f32 %v514, %v402
        %516 = vst.msk [vmem:[%s315] sm:$0xff] %vm339, %v515
        %v517 = vld [vmem:[%s324] sm:$0xf]
        %v518 = vld [vmem:[%s330] sm:$0xf]
        %v519 = vld [vmem:[%s336] sm:$0xf]
        %v521 = vunpack.c.l.b16 %v517
        %v522 = vpack.c.b16 %v521, %v521
        %523 = vrot.lane.b32.xlu0 %v522, 96
        %v524 = vpop.permute.xlu0 %523
        %v526 = vunpack.c.l.b16 %v518
        %v527 = vpack.c.b16 %v526, %v526
        %528 = vrot.lane.b32.xlu0 %v527, 96
        %v529 = vpop.permute.xlu0 %528
        %v531 = vsel %vm344, %v524, 0
        %v534 = vsel %vm344, %v529, 0
        %536 = vmatprep.subr.bf16.mxu0 0
        %537 = vmatpush1.bf16.xpose.msra.mxu0 0
        %538 = vmatprep.subr.bf16.mxu0 0
        %539 = vmatpush1.bf16.xpose.msra.mxu0 0
        %540 = vmatprep.subr.bf16.mxu0 0
        %541 = vmatpush1.bf16.xpose.msra.mxu0 0
        %542 = vmatprep.subr.bf16.mxu0 0
        %543 = vmatpush1.bf16.xpose.msra.mxu0 0
        %544 = vmatprep.subr.bf16.mxu0 0
        %545 = vmatpush1.bf16.xpose.msra.mxu0 0
        %546 = vmatprep.subr.bf16.mxu0 0
        %547 = vmatpush1.bf16.xpose.msra.mxu0 0
        %548 = vmatprep.subr.bf16.mxu0 0
        %549 = vmatpush1.bf16.xpose.msra.mxu0 0
        %550 = vmatprep.subr.bf16.mxu0 0
        %551 = vmatpush1.bf16.xpose.msra.mxu0 %v534
        %552 = vmatprep.subr.bf16.mxu0 0
        %553 = vmatpush2.bf16.xpose.msra.mxu0 0
        %554 = vmatprep.subr.bf16.mxu0 0
        %555 = vmatpush2.bf16.xpose.msra.mxu0 0
        %556 = vmatprep.subr.bf16.mxu0 0
        %557 = vmatpush2.bf16.xpose.msra.mxu0 0
        %558 = vmatprep.subr.bf16.mxu0 0
        %559 = vmatpush2.bf16.xpose.msra.mxu0 0
        %560 = vmatprep.subr.bf16.mxu0 0
        %561 = vmatpush2.bf16.xpose.msra.mxu0 0
        %562 = vmatprep.subr.bf16.mxu0 0
        %563 = vmatpush2.bf16.xpose.msra.mxu0 0
        %564 = vmatprep.subr.bf16.mxu0 0
        %565 = vmatpush2.bf16.xpose.msra.mxu0 0
        %566 = vmatprep.subr.bf16.mxu0 0
        %567 = vmatpush2.bf16.xpose.msra.mxu0 0
        %568 = vmatprep.mubr.bf16.mxu0 0
        %569 = vmatmul.mubr.bf16.gmra.mxu0 %v531
        %v570 = vpop.f32.mrf.mxu0
        %v571 = vadd.f32 0.0, %v570
        %v572 = vpop.f32.mrf.mxu0
        %v573 = vpop.f32.mrf.mxu0
        %v574 = vpop.f32.mrf.mxu0
        %575 = vdwg.mxu0
        %v576 = vmul.f32 %v571, 0.17677669
        %v577 = vsel %vm339, %v576, -inf
        %578 = vmax.xlane.f32.xlu0 %v577
        %v579 = vpop.xlane.xlu0 %578
        %v580 = vsub.f32 %v576, %v579
        %v581 = vmul.f32 %v580, 1.442695
        %v582 = vpow.pop %v581
        %v583 = vsel %vm339, %v582, 0.0
        %584 = vadd.xlane.f32.xlu0 %v583
        %v585 = vpop.xlane.xlu0 %584
        %v586 = vrcp.pop %v585
        %v587 = vmul.f32 %v582, %v586
        %v588 = vpack.c.bf16 %v587, %v587
        %v590 = vunpack.c.l.b16 %v519
        %v591 = vpack.c.b16 %v590, %v590
        %592 = vrot.lane.b32.xlu0 %v591, 96
        %v593 = vpop.permute.xlu0 %592
        %v595 = vsel %vm339, %v588, 0
        %v598 = vsel %vm407, %v593, 0
        %600 = vmatprep.subr.bf16.mxu0 0
        %601 = vmatpush1.bf16.msra.mxu0 0
        %602 = vmatprep.subr.bf16.mxu0 0
        %603 = vmatpush1.bf16.msra.mxu0 0
        %604 = vmatprep.subr.bf16.mxu0 0
        %605 = vmatpush1.bf16.msra.mxu0 0
        %606 = vmatprep.subr.bf16.mxu0 0
        %607 = vmatpush1.bf16.msra.mxu0 0
        %608 = vmatprep.subr.bf16.mxu0 0
        %609 = vmatpush1.bf16.msra.mxu0 0
        %610 = vmatprep.subr.bf16.mxu0 0
        %611 = vmatpush1.bf16.msra.mxu0 0
        %612 = vmatprep.subr.bf16.mxu0 0
        %613 = vmatpush1.bf16.msra.mxu0 0
        %614 = vmatprep.subr.bf16.mxu0 0
        %615 = vmatpush1.bf16.msra.mxu0 %v598
        %616 = vmatprep.subr.bf16.mxu0 0
        %617 = vmatpush2.bf16.msra.mxu0 0
        %618 = vmatprep.subr.bf16.mxu0 0
        %619 = vmatpush2.bf16.msra.mxu0 0
        %620 = vmatprep.subr.bf16.mxu0 0
        %621 = vmatpush2.bf16.msra.mxu0 0
        %622 = vmatprep.subr.bf16.mxu0 0
        %623 = vmatpush2.bf16.msra.mxu0 0
        %624 = vmatprep.subr.bf16.mxu0 0
        %625 = vmatpush2.bf16.msra.mxu0 0
        %626 = vmatprep.subr.bf16.mxu0 0
        %627 = vmatpush2.bf16.msra.mxu0 0
        %628 = vmatprep.subr.bf16.mxu0 0
        %629 = vmatpush2.bf16.msra.mxu0 0
        %630 = vmatprep.subr.bf16.mxu0 0
        %631 = vmatpush2.bf16.msra.mxu0 0
        %632 = vmatprep.mubr.bf16.mxu0 0
        %633 = vmatmul.mubr.bf16.gmra.mxu0 %v595
        %v634 = vpop.f32.mrf.mxu0
        %v635 = vadd.f32 0.0, %v634
        %v636 = vpop.f32.mrf.mxu0
        %v637 = vpop.f32.mrf.mxu0
        %v638 = vpop.f32.mrf.mxu0
        %639 = vdwg.mxu0
        %v640 = vld [vmem:[%s308] sm:$0xff]
        %v641 = vpack.c.bf16 %v635, %v635
        %v642 = vld [vmem:[%s3 + $0x10] sm:$0xf]
        %v643 = vld [vmem:[%s3 + $0x14] sm:$0xf]
        %v644 = vld [vmem:[%s3 + $0x18] sm:$0xf]
        %v645 = vld [vmem:[%s3 + $0x1c] sm:$0xf]
        %v650 = vunpack.c.l.b16 %v642
        %v651 = vunpack.c.l.b16 %v643
        %v652 = vunpack.c.l.b16 %v644
        %v653 = vunpack.c.l.b16 %v645
        %v654 = vpack.c.b16 %v651, %v650
        %v655 = vpack.c.b16 %v653, %v652
        %v659 = vsel %vm344, %v641, 0
        %661 = vmatprep.subr.bf16.mxu0 0
        %662 = vmatpush1.bf16.msra.mxu0 0
        %663 = vmatprep.subr.bf16.mxu0 0
        %664 = vmatpush1.bf16.msra.mxu0 0
        %665 = vmatprep.subr.bf16.mxu0 0
        %666 = vmatpush1.bf16.msra.mxu0 0
        %667 = vmatprep.subr.bf16.mxu0 0
        %668 = vmatpush1.bf16.msra.mxu0 0
        %669 = vmatprep.subr.bf16.mxu0 0
        %670 = vmatpush1.bf16.msra.mxu0 0
        %671 = vmatprep.subr.bf16.mxu0 0
        %672 = vmatpush1.bf16.msra.mxu0 0
        %673 = vmatprep.subr.bf16.mxu0 0
        %674 = vmatpush1.bf16.msra.mxu0 %v655
        %675 = vmatprep.subr.bf16.mxu0 0
        %676 = vmatpush1.bf16.msra.mxu0 %v654
        %677 = vmatprep.subr.bf16.mxu0 0
        %678 = vmatpush2.bf16.msra.mxu0 0
        %679 = vmatprep.subr.bf16.mxu0 0
        %680 = vmatpush2.bf16.msra.mxu0 0
        %681 = vmatprep.subr.bf16.mxu0 0
        %682 = vmatpush2.bf16.msra.mxu0 0
        %683 = vmatprep.subr.bf16.mxu0 0
        %684 = vmatpush2.bf16.msra.mxu0 0
        %685 = vmatprep.subr.bf16.mxu0 0
        %686 = vmatpush2.bf16.msra.mxu0 0
        %687 = vmatprep.subr.bf16.mxu0 0
        %688 = vmatpush2.bf16.msra.mxu0 0
        %689 = vmatprep.subr.bf16.mxu0 0
        %690 = vmatpush2.bf16.msra.mxu0 0
        %691 = vmatprep.subr.bf16.mxu0 0
        %692 = vmatpush2.bf16.msra.mxu0 0
        %693 = vmatprep.mubr.bf16.mxu0 0
        %694 = vmatmul.mubr.bf16.gmra.mxu0 %v659
        %v695 = vpop.f32.mrf.mxu0
        %v696 = vadd.f32 0.0, %v695
        %v697 = vpop.f32.mrf.mxu0
        %v698 = vpop.f32.mrf.mxu0
        %v699 = vpop.f32.mrf.mxu0
        %700 = vdwg.mxu0
        %v701 = vadd.f32 %v640, %v696
        %702 = vst [vmem:[%s308] sm:$0xff] %v701
        %v703 = vld [vmem:[%s315] sm:$0xff]
        %v704 = vadd.f32 %v703, %v587
        %705 = vst.msk [vmem:[%s315] sm:$0xff] %vm339, %v704
        %v706 = vld [vmem:[%s324] sm:$0xf]
        %v707 = vld [vmem:[%s330] sm:$0xf]
        %v708 = vld [vmem:[%s336] sm:$0xf]
        %v710 = vunpack.c.l.b16 %v706
        %v711 = vpack.c.b16 %v710, %v710
        %712 = vrot.lane.b32.xlu0 %v711, 64
        %v713 = vpop.permute.xlu0 %712
        %v715 = vunpack.c.l.b16 %v707
        %v716 = vpack.c.b16 %v715, %v715
        %717 = vrot.lane.b32.xlu0 %v716, 64
        %v718 = vpop.permute.xlu0 %717
        %v720 = vsel %vm344, %v713, 0
        %v723 = vsel %vm344, %v718, 0
        %725 = vmatprep.subr.bf16.mxu0 0
        %726 = vmatpush1.bf16.xpose.msra.mxu0 0
        %727 = vmatprep.subr.bf16.mxu0 0
        %728 = vmatpush1.bf16.xpose.msra.mxu0 0
        %729 = vmatprep.subr.bf16.mxu0 0
        %730 = vmatpush1.bf16.xpose.msra.mxu0 0
        %731 = vmatprep.subr.bf16.mxu0 0
        %732 = vmatpush1.bf16.xpose.msra.mxu0 0
        %733 = vmatprep.subr.bf16.mxu0 0
        %734 = vmatpush1.bf16.xpose.msra.mxu0 0
        %735 = vmatprep.subr.bf16.mxu0 0
        %736 = vmatpush1.bf16.xpose.msra.mxu0 0
        %737 = vmatprep.subr.bf16.mxu0 0
        %738 = vmatpush1.bf16.xpose.msra.mxu0 0
        %739 = vmatprep.subr.bf16.mxu0 0
        %740 = vmatpush1.bf16.xpose.msra.mxu0 %v723
        %741 = vmatprep.subr.bf16.mxu0 0
        %742 = vmatpush2.bf16.xpose.msra.mxu0 0
        %743 = vmatprep.subr.bf16.mxu0 0
        %744 = vmatpush2.bf16.xpose.msra.mxu0 0
        %745 = vmatprep.subr.bf16.mxu0 0
        %746 = vmatpush2.bf16.xpose.msra.mxu0 0
        %747 = vmatprep.subr.bf16.mxu0 0
        %748 = vmatpush2.bf16.xpose.msra.mxu0 0
        %749 = vmatprep.subr.bf16.mxu0 0
        %750 = vmatpush2.bf16.xpose.msra.mxu0 0
        %751 = vmatprep.subr.bf16.mxu0 0
        %752 = vmatpush2.bf16.xpose.msra.mxu0 0
        %753 = vmatprep.subr.bf16.mxu0 0
        %754 = vmatpush2.bf16.xpose.msra.mxu0 0
        %755 = vmatprep.subr.bf16.mxu0 0
        %756 = vmatpush2.bf16.xpose.msra.mxu0 0
        %757 = vmatprep.mubr.bf16.mxu0 0
        %758 = vmatmul.mubr.bf16.gmra.mxu0 %v720
        %v759 = vpop.f32.mrf.mxu0
        %v760 = vadd.f32 0.0, %v759
        %v761 = vpop.f32.mrf.mxu0
        %v762 = vpop.f32.mrf.mxu0
        %v763 = vpop.f32.mrf.mxu0
        %764 = vdwg.mxu0
        %v765 = vmul.f32 %v760, 0.17677669
        %v766 = vsel %vm339, %v765, -inf
        %767 = vmax.xlane.f32.xlu0 %v766
        %v768 = vpop.xlane.xlu0 %767
        %v769 = vsub.f32 %v765, %v768
        %v770 = vmul.f32 %v769, 1.442695
        %v771 = vpow.pop %v770
        %v772 = vsel %vm339, %v771, 0.0
        %773 = vadd.xlane.f32.xlu0 %v772
        %v774 = vpop.xlane.xlu0 %773
        %v775 = vrcp.pop %v774
        %v776 = vmul.f32 %v771, %v775
        %v777 = vpack.c.bf16 %v776, %v776
        %v779 = vunpack.c.l.b16 %v708
        %v780 = vpack.c.b16 %v779, %v779
        %781 = vrot.lane.b32.xlu0 %v780, 64
        %v782 = vpop.permute.xlu0 %781
        %v784 = vsel %vm339, %v777, 0
        %v787 = vsel %vm407, %v782, 0
        %789 = vmatprep.subr.bf16.mxu0 0
        %790 = vmatpush1.bf16.msra.mxu0 0
        %791 = vmatprep.subr.bf16.mxu0 0
        %792 = vmatpush1.bf16.msra.mxu0 0
        %793 = vmatprep.subr.bf16.mxu0 0
        %794 = vmatpush1.bf16.msra.mxu0 0
        %795 = vmatprep.subr.bf16.mxu0 0
        %796 = vmatpush1.bf16.msra.mxu0 0
        %797 = vmatprep.subr.bf16.mxu0 0
        %798 = vmatpush1.bf16.msra.mxu0 0
        %799 = vmatprep.subr.bf16.mxu0 0
        %800 = vmatpush1.bf16.msra.mxu0 0
        %801 = vmatprep.subr.bf16.mxu0 0
        %802 = vmatpush1.bf16.msra.mxu0 0
        %803 = vmatprep.subr.bf16.mxu0 0
        %804 = vmatpush1.bf16.msra.mxu0 %v787
        %805 = vmatprep.subr.bf16.mxu0 0
        %806 = vmatpush2.bf16.msra.mxu0 0
        %807 = vmatprep.subr.bf16.mxu0 0
        %808 = vmatpush2.bf16.msra.mxu0 0
        %809 = vmatprep.subr.bf16.mxu0 0
        %810 = vmatpush2.bf16.msra.mxu0 0
        %811 = vmatprep.subr.bf16.mxu0 0
        %812 = vmatpush2.bf16.msra.mxu0 0
        %813 = vmatprep.subr.bf16.mxu0 0
        %814 = vmatpush2.bf16.msra.mxu0 0
        %815 = vmatprep.subr.bf16.mxu0 0
        %816 = vmatpush2.bf16.msra.mxu0 0
        %817 = vmatprep.subr.bf16.mxu0 0
        %818 = vmatpush2.bf16.msra.mxu0 0
        %819 = vmatprep.subr.bf16.mxu0 0
        %820 = vmatpush2.bf16.msra.mxu0 0
        %821 = vmatprep.mubr.bf16.mxu0 0
        %822 = vmatmul.mubr.bf16.gmra.mxu0 %v784
        %v823 = vpop.f32.mrf.mxu0
        %v824 = vadd.f32 0.0, %v823
        %v825 = vpop.f32.mrf.mxu0
        %v826 = vpop.f32.mrf.mxu0
        %v827 = vpop.f32.mrf.mxu0
        %828 = vdwg.mxu0
        %v829 = vld [vmem:[%s308] sm:$0xff]
        %v830 = vpack.c.bf16 %v824, %v824
        %v831 = vld [vmem:[%s3 + $0x20] sm:$0xf]
        %v832 = vld [vmem:[%s3 + $0x24] sm:$0xf]
        %v833 = vld [vmem:[%s3 + $0x28] sm:$0xf]
        %v834 = vld [vmem:[%s3 + $0x2c] sm:$0xf]
        %v839 = vunpack.c.l.b16 %v831
        %v840 = vunpack.c.l.b16 %v832
        %v841 = vunpack.c.l.b16 %v833
        %v842 = vunpack.c.l.b16 %v834
        %v843 = vpack.c.b16 %v840, %v839
        %v844 = vpack.c.b16 %v842, %v841
        %v848 = vsel %vm344, %v830, 0
        %850 = vmatprep.subr.bf16.mxu0 0
        %851 = vmatpush1.bf16.msra.mxu0 0
        %852 = vmatprep.subr.bf16.mxu0 0
        %853 = vmatpush1.bf16.msra.mxu0 0
        %854 = vmatprep.subr.bf16.mxu0 0
        %855 = vmatpush1.bf16.msra.mxu0 0
        %856 = vmatprep.subr.bf16.mxu0 0
        %857 = vmatpush1.bf16.msra.mxu0 0
        %858 = vmatprep.subr.bf16.mxu0 0
        %859 = vmatpush1.bf16.msra.mxu0 0
        %860 = vmatprep.subr.bf16.mxu0 0
        %861 = vmatpush1.bf16.msra.mxu0 0
        %862 = vmatprep.subr.bf16.mxu0 0
        %863 = vmatpush1.bf16.msra.mxu0 %v844
        %864 = vmatprep.subr.bf16.mxu0 0
        %865 = vmatpush1.bf16.msra.mxu0 %v843
        %866 = vmatprep.subr.bf16.mxu0 0
        %867 = vmatpush2.bf16.msra.mxu0 0
        %868 = vmatprep.subr.bf16.mxu0 0
        %869 = vmatpush2.bf16.msra.mxu0 0
        %870 = vmatprep.subr.bf16.mxu0 0
        %871 = vmatpush2.bf16.msra.mxu0 0
        %872 = vmatprep.subr.bf16.mxu0 0
        %873 = vmatpush2.bf16.msra.mxu0 0
        %874 = vmatprep.subr.bf16.mxu0 0
        %875 = vmatpush2.bf16.msra.mxu0 0
        %876 = vmatprep.subr.bf16.mxu0 0
        %877 = vmatpush2.bf16.msra.mxu0 0
        %878 = vmatprep.subr.bf16.mxu0 0
        %879 = vmatpush2.bf16.msra.mxu0 0
        %880 = vmatprep.subr.bf16.mxu0 0
        %881 = vmatpush2.bf16.msra.mxu0 0
        %882 = vmatprep.mubr.bf16.mxu0 0
        %883 = vmatmul.mubr.bf16.gmra.mxu0 %v848
        %v884 = vpop.f32.mrf.mxu0
        %v885 = vadd.f32 0.0, %v884
        %v886 = vpop.f32.mrf.mxu0
        %v887 = vpop.f32.mrf.mxu0
        %v888 = vpop.f32.mrf.mxu0
        %889 = vdwg.mxu0
        %v890 = vadd.f32 %v829, %v885
        %891 = vst [vmem:[%s308] sm:$0xff] %v890
        %v892 = vld [vmem:[%s315] sm:$0xff]
        %v893 = vadd.f32 %v892, %v776
        %894 = vst.msk [vmem:[%s315] sm:$0xff] %vm339, %v893
        %v895 = vld [vmem:[%s324] sm:$0xf]
        %v896 = vld [vmem:[%s330] sm:$0xf]
        %v897 = vld [vmem:[%s336] sm:$0xf]
        %v899 = vunpack.c.l.b16 %v895
        %v900 = vpack.c.b16 %v899, %v899
        %901 = vrot.lane.b32.xlu0 %v900, 32
        %v902 = vpop.permute.xlu0 %901
        %v904 = vunpack.c.l.b16 %v896
        %v905 = vpack.c.b16 %v904, %v904
        %906 = vrot.lane.b32.xlu0 %v905, 32
        %v907 = vpop.permute.xlu0 %906
        %v909 = vsel %vm344, %v902, 0
        %v912 = vsel %vm344, %v907, 0
        %914 = vmatprep.subr.bf16.mxu0 0
        %915 = vmatpush1.bf16.xpose.msra.mxu0 0
        %916 = vmatprep.subr.bf16.mxu0 0
        %917 = vmatpush1.bf16.xpose.msra.mxu0 0
        %918 = vmatprep.subr.bf16.mxu0 0
        %919 = vmatpush1.bf16.xpose.msra.mxu0 0
        %920 = vmatprep.subr.bf16.mxu0 0
        %921 = vmatpush1.bf16.xpose.msra.mxu0 0
        %922 = vmatprep.subr.bf16.mxu0 0
        %923 = vmatpush1.bf16.xpose.msra.mxu0 0
        %924 = vmatprep.subr.bf16.mxu0 0
        %925 = vmatpush1.bf16.xpose.msra.mxu0 0
        %926 = vmatprep.subr.bf16.mxu0 0
        %927 = vmatpush1.bf16.xpose.msra.mxu0 0
        %928 = vmatprep.subr.bf16.mxu0 0
        %929 = vmatpush1.bf16.xpose.msra.mxu0 %v912
        %930 = vmatprep.subr.bf16.mxu0 0
        %931 = vmatpush2.bf16.xpose.msra.mxu0 0
        %932 = vmatprep.subr.bf16.mxu0 0
        %933 = vmatpush2.bf16.xpose.msra.mxu0 0
        %934 = vmatprep.subr.bf16.mxu0 0
        %935 = vmatpush2.bf16.xpose.msra.mxu0 0
        %936 = vmatprep.subr.bf16.mxu0 0
        %937 = vmatpush2.bf16.xpose.msra.mxu0 0
        %938 = vmatprep.subr.bf16.mxu0 0
        %939 = vmatpush2.bf16.xpose.msra.mxu0 0
        %940 = vmatprep.subr.bf16.mxu0 0
        %941 = vmatpush2.bf16.xpose.msra.mxu0 0
        %942 = vmatprep.subr.bf16.mxu0 0
        %943 = vmatpush2.bf16.xpose.msra.mxu0 0
        %944 = vmatprep.subr.bf16.mxu0 0
        %945 = vmatpush2.bf16.xpose.msra.mxu0 0
        %946 = vmatprep.mubr.bf16.mxu0 0
        %947 = vmatmul.mubr.bf16.gmra.mxu0 %v909
        %v948 = vpop.f32.mrf.mxu0
        %v949 = vadd.f32 0.0, %v948
        %v950 = vpop.f32.mrf.mxu0
        %v951 = vpop.f32.mrf.mxu0
        %v952 = vpop.f32.mrf.mxu0
        %953 = vdwg.mxu0
        %v954 = vmul.f32 %v949, 0.17677669
        %v955 = vsel %vm339, %v954, -inf
        %956 = vmax.xlane.f32.xlu0 %v955
        %v957 = vpop.xlane.xlu0 %956
        %v958 = vsub.f32 %v954, %v957
        %v959 = vmul.f32 %v958, 1.442695
        %v960 = vpow.pop %v959
        %v961 = vsel %vm339, %v960, 0.0
        %962 = vadd.xlane.f32.xlu0 %v961
        %v963 = vpop.xlane.xlu0 %962
        %v964 = vrcp.pop %v963
        %v965 = vmul.f32 %v960, %v964
        %v966 = vpack.c.bf16 %v965, %v965
        %v968 = vunpack.c.l.b16 %v897
        %v969 = vpack.c.b16 %v968, %v968
        %970 = vrot.lane.b32.xlu0 %v969, 32
        %v971 = vpop.permute.xlu0 %970
        %v973 = vsel %vm339, %v966, 0
        %v976 = vsel %vm407, %v971, 0
        %978 = vmatprep.subr.bf16.mxu0 0
        %979 = vmatpush1.bf16.msra.mxu0 0
        %980 = vmatprep.subr.bf16.mxu0 0
        %981 = vmatpush1.bf16.msra.mxu0 0
        %982 = vmatprep.subr.bf16.mxu0 0
        %983 = vmatpush1.bf16.msra.mxu0 0
        %984 = vmatprep.subr.bf16.mxu0 0
        %985 = vmatpush1.bf16.msra.mxu0 0
        %986 = vmatprep.subr.bf16.mxu0 0
        %987 = vmatpush1.bf16.msra.mxu0 0
        %988 = vmatprep.subr.bf16.mxu0 0
        %989 = vmatpush1.bf16.msra.mxu0 0
        %990 = vmatprep.subr.bf16.mxu0 0
        %991 = vmatpush1.bf16.msra.mxu0 0
        %992 = vmatprep.subr.bf16.mxu0 0
        %993 = vmatpush1.bf16.msra.mxu0 %v976
        %994 = vmatprep.subr.bf16.mxu0 0
        %995 = vmatpush2.bf16.msra.mxu0 0
        %996 = vmatprep.subr.bf16.mxu0 0
        %997 = vmatpush2.bf16.msra.mxu0 0
        %998 = vmatprep.subr.bf16.mxu0 0
        %999 = vmatpush2.bf16.msra.mxu0 0
        %1000 = vmatprep.subr.bf16.mxu0 0
        %1001 = vmatpush2.bf16.msra.mxu0 0
        %1002 = vmatprep.subr.bf16.mxu0 0
        %1003 = vmatpush2.bf16.msra.mxu0 0
        %1004 = vmatprep.subr.bf16.mxu0 0
        %1005 = vmatpush2.bf16.msra.mxu0 0
        %1006 = vmatprep.subr.bf16.mxu0 0
        %1007 = vmatpush2.bf16.msra.mxu0 0
        %1008 = vmatprep.subr.bf16.mxu0 0
        %1009 = vmatpush2.bf16.msra.mxu0 0
        %1010 = vmatprep.mubr.bf16.mxu0 0
        %1011 = vmatmul.mubr.bf16.gmra.mxu0 %v973
        %v1012 = vpop.f32.mrf.mxu0
        %v1013 = vadd.f32 0.0, %v1012
        %v1014 = vpop.f32.mrf.mxu0
        %v1015 = vpop.f32.mrf.mxu0
        %v1016 = vpop.f32.mrf.mxu0
        %1017 = vdwg.mxu0
        %v1018 = vld [vmem:[%s308] sm:$0xff]
        %v1019 = vpack.c.bf16 %v1013, %v1013
        %v1020 = vld [vmem:[%s3 + $0x30] sm:$0xf]
        %v1021 = vld [vmem:[%s3 + $0x34] sm:$0xf]
        %v1022 = vld [vmem:[%s3 + $0x38] sm:$0xf]
        %v1023 = vld [vmem:[%s3 + $0x3c] sm:$0xf]
        %v1028 = vunpack.c.l.b16 %v1020
        %v1029 = vunpack.c.l.b16 %v1021
        %v1030 = vunpack.c.l.b16 %v1022
        %v1031 = vunpack.c.l.b16 %v1023
        %v1032 = vpack.c.b16 %v1029, %v1028
        %v1033 = vpack.c.b16 %v1031, %v1030
        %v1037 = vsel %vm344, %v1019, 0
        %1039 = vmatprep.subr.bf16.mxu0 0
        %1040 = vmatpush1.bf16.msra.mxu0 0
        %1041 = vmatprep.subr.bf16.mxu0 0
        %1042 = vmatpush1.bf16.msra.mxu0 0
        %1043 = vmatprep.subr.bf16.mxu0 0
        %1044 = vmatpush1.bf16.msra.mxu0 0
        %1045 = vmatprep.subr.bf16.mxu0 0
        %1046 = vmatpush1.bf16.msra.mxu0 0
        %1047 = vmatprep.subr.bf16.mxu0 0
        %1048 = vmatpush1.bf16.msra.mxu0 0
        %1049 = vmatprep.subr.bf16.mxu0 0
        %1050 = vmatpush1.bf16.msra.mxu0 0
        %1051 = vmatprep.subr.bf16.mxu0 0
        %1052 = vmatpush1.bf16.msra.mxu0 %v1033
        %1053 = vmatprep.subr.bf16.mxu0 0
        %1054 = vmatpush1.bf16.msra.mxu0 %v1032
        %1055 = vmatprep.subr.bf16.mxu0 0
        %1056 = vmatpush2.bf16.msra.mxu0 0
        %1057 = vmatprep.subr.bf16.mxu0 0
        %1058 = vmatpush2.bf16.msra.mxu0 0
        %1059 = vmatprep.subr.bf16.mxu0 0
        %1060 = vmatpush2.bf16.msra.mxu0 0
        %1061 = vmatprep.subr.bf16.mxu0 0
        %1062 = vmatpush2.bf16.msra.mxu0 0
        %1063 = vmatprep.subr.bf16.mxu0 0
        %1064 = vmatpush2.bf16.msra.mxu0 0
        %1065 = vmatprep.subr.bf16.mxu0 0
        %1066 = vmatpush2.bf16.msra.mxu0 0
        %1067 = vmatprep.subr.bf16.mxu0 0
        %1068 = vmatpush2.bf16.msra.mxu0 0
        %1069 = vmatprep.subr.bf16.mxu0 0
        %1070 = vmatpush2.bf16.msra.mxu0 0
        %1071 = vmatprep.mubr.bf16.mxu0 0
        %1072 = vmatmul.mubr.bf16.gmra.mxu0 %v1037
        %v1073 = vpop.f32.mrf.mxu0
        %v1074 = vadd.f32 0.0, %v1073
        %v1075 = vpop.f32.mrf.mxu0
        %v1076 = vpop.f32.mrf.mxu0
        %v1077 = vpop.f32.mrf.mxu0
        %1078 = vdwg.mxu0
        %v1079 = vadd.f32 %v1018, %v1074
        %1080 = vst [vmem:[%s308] sm:$0xff] %v1079
        %v1081 = vld [vmem:[%s315] sm:$0xff]
        %v1082 = vadd.f32 %v1081, %v965
        %1083 = vst.msk [vmem:[%s315] sm:$0xff] %vm339, %v1082
        %v1084 = vld [vmem:[%s308] sm:$0xff]
        %v1085 = vld [vmem:[%s4] sm:$0x1]
        %v1087 = vlaneseq
        %v1088 = vshrl.u32 %v1087, 7
        %v1089 = vsub.s32 0, %v1088
        %v1090 = vrot.slane %v1085, %v1089
        %v1092 = vadd.f32 %v1084, %v1090
        %1093 = vst [vmem:[%s308] sm:$0xff] %v1092
        %v1094 = vld [vmem:[%s315] sm:$0xff]
        %v1095 = vmul.f32 %v1094, 0.25
        %1096 = vst.msk [vmem:[%s315] sm:$0xff] %vm339, %v1095
        %s1097 = sand.u32 %s168, 1
        %s1098 = scalar_lea.sflag [#allocation3], %s1097
        %s1099 = sand.u32 %s168, 1
        %s1100 = smul.addr %s1099, 8
        %s1101 = scalar_lea.vmem [#allocation2], %s1100
        %s1102 = sand.u32 %s196, 1
        %s1103 = scalar_lea.sflag [#allocation5], %s1102
        %s1104 = sand.u32 %s196, 1
        %s1105 = smul.addr %s1104, 8
        %s1106 = scalar_lea.vmem [#allocation4], %s1105
        // Predicated region
        $region41: #{multihead_attention_forward.3} parent=39 // pred_check
          %p1107 = pneg %p178
        $region42: #{multihead_attention_forward.3} parent=39 // pred_check_branch
          %1109 = sbr.rel (%p1107) target = $region44
        $region43: #{multihead_attention_forward.3} parent=39 // pred_region
          %s1111 = ssub.s32 128, 128
          %1112 = vsyncadd %s1098, %s1111
          %s1113 = sadd.s32 %s29, %s28
          %s1114 = smul.addr %s1113, 128
          %s1115 = scalar_lea.hbm %s5, %s1114
          %s1117 = sshll.u32 %s1101, 4
          %s1118 = int_to_ptr.vmem [resolvable:$true] %s1117
          %1120 = dma.vmem_to_hbm [thread:$0]  %s1118, 128, %s1115, %s1098
        $region44: #{multihead_attention_forward.3} parent=39 // pred_fallthru
          _
        // Predicated region
        $region45: #{multihead_attention_forward.3} parent=39 // pred_check
          %p1121 = pneg %p206
        $region46: #{multihead_attention_forward.3} parent=39 // pred_check_branch
          %1123 = sbr.rel (%p1121) target = $region48
        $region47: #{multihead_attention_forward.3} parent=39 // pred_region
          %s1125 = ssub.s32 128, 128
          %1126 = vsyncadd %s1103, %s1125
          %s1127 = sadd.s32 %s29, %s28
          %s1128 = smul.addr %s1127, 128
          %s1129 = scalar_lea.hbm %s6, %s1128
          %s1131 = sshll.u32 %s1106, 4
          %s1132 = int_to_ptr.vmem [resolvable:$true] %s1131
          %1134 = dma.vmem_to_hbm [thread:$0]  %s1132, 128, %s1129, %s1103
        $region48: #{multihead_attention_forward.3} parent=39 // pred_fallthru
          _
      $region40: #{multihead_attention_forward.3} parent=5 // pred_fallthru
        _
      %p1135 = scmp.le.s32.totalorder 2, %s19
      // Predicated region
      $region49: #{multihead_attention_forward.3} parent=5 // pred_check
        %p1136 = pneg %p1135
      $region50: #{multihead_attention_forward.3} parent=5 // pred_check_branch
        %1138 = sbr.rel (%p1136) target = $region52
      $region51: #{multihead_attention_forward.3} parent=5 // pred_region
        %s1139 = ssub.s32 %s19, 2
        // Predicated region
        $region53: #{multihead_attention_forward.3} parent=51 // pred_check
          %p1140 = pneg %p184
        $region54: #{multihead_attention_forward.3} parent=51 // pred_check_branch
          %1142 = sbr.rel (%p1140) target = $region56
        $region55: #{multihead_attention_forward.3} parent=51 // pred_region
          %s1143 = sand.u32 %s169, 1
          %s1144 = scalar_lea.sflag [#allocation3], %s1143
          %s1145 = sand.u32 %s169, 1
          %s1146 = smul.addr %s1145, 8
          %s1147 = scalar_lea.vmem [#allocation2], %s1146
          %1148 = dma.done %s1144, 128
        $region56: #{multihead_attention_forward.3} parent=51 // pred_fallthru
          _
        // Predicated region
        $region57: #{multihead_attention_forward.3} parent=51 // pred_check
          %p1149 = pneg %p212
        $region58: #{multihead_attention_forward.3} parent=51 // pred_check_branch
          %1151 = sbr.rel (%p1149) target = $region60
        $region59: #{multihead_attention_forward.3} parent=51 // pred_region
          %s1152 = sand.u32 %s197, 1
          %s1153 = scalar_lea.sflag [#allocation5], %s1152
          %s1154 = sand.u32 %s197, 1
          %s1155 = smul.addr %s1154, 8
          %s1156 = scalar_lea.vmem [#allocation4], %s1155
          %1157 = dma.done %s1153, 128
        $region60: #{multihead_attention_forward.3} parent=51 // pred_fallthru
          _
      $region52: #{multihead_attention_forward.3} parent=5 // pred_fallthru
        _
    $region6: #{multihead_attention_forward.3} parent=1 // loop_footer
      %s23 = sadd.s32 1, %s19
    $region7: #{multihead_attention_forward.3} parent=1 // loop_footer_branch
      %18 = sbr.rel target = $region3
    $region8: #{multihead_attention_forward.3} parent=1 // loop_exit
      _
    %1158 = vsyncpa [#allocation3], 1
    %s1159 = scalar_lea.sflag [#allocation3], 1
    %1160 = vsyncpa %s1159, 1
    %1161 = vsyncpa [#allocation5], 1
    %s1162 = scalar_lea.sflag [#allocation5], 1
    %1163 = vsyncpa %s1162, 1

</llo_original>
